<compile_context>
chip_gen: v6e
topology: v6e:2x2x1
jax: 0.10.0
libtpu: 0.0.40
codegen_flags: <defaults>
</compile_context>

<pallas_src>
import jax
import jax.numpy as jnp
from jax.experimental import pallas as pl
from jax.experimental.pallas import tpu as pltpu

BACKBONE_DIM = 512      # resnet18 feature width feeding resnet.fc
LANE = 128
SUBLANE_BF16 = 16       # bf16-native sublane granularity for the streamed x tiles
K_TILE_MAX = 512        # K-reduction tile: VMEM use independent of image size
BATCH_TILE_MAX = 256    # one full MXU M pass on v6e/v7x, two 128-row passes on v5e


def _round_up(x, m):
    return ((x + m - 1) // m) * m


def _k_tiling(k):
    """K-reduction tile and padded K."""
    tk = min(K_TILE_MAX, _round_up(k, LANE))
    return tk, _round_up(k, tk)


def _batch_tiling(b):
    """Batch tile and padded batch: fill the MXU M dim but keep >=2 grid steps
    when the batch allows it (so the 'parallel' axis uses both v7x TCs)."""
    b16 = _round_up(max(b, SUBLANE_BF16), SUBLANE_BF16)
    if b16 >= 2 * SUBLANE_BF16:
        tb = min(BATCH_TILE_MAX, _round_up((b16 + 1) // 2, SUBLANE_BF16))
    else:
        tb = b16
    return tb, _round_up(b16, tb)


# ----------------------------- Pallas kernel --------------------------------

def _rotation_encoder_kernel(x_ref, wt_ref, bt_ref, wf_ref, bf_ref, o_ref,
                             acc_ref):
    """Fused: [trunk stand-in Linear + ReLU] -> [resnet.fc Linear].

    Grid = (batch tiles [parallel], K tiles [arbitrary, last]).

    x_ref : (TB, TK)     bf16  flattened-image tile (batch & K tiled)
    wt_ref: (TK, 512)    bf16  trunk stand-in weight K-slice
    bt_ref: (1, 512)     f32   trunk stand-in bias
    wf_ref: (512, N_pad) bf16  fc weight, feature dim zero-padded to 128 lanes
    bf_ref: (1, N_pad)   f32   fc bias (padded lanes are zero)
    o_ref : (TB, N_pad)  f32   lane-dense output tile (written on last K step)
    acc_ref: (TB, 512)   f32   VMEM accumulator for the K reduction
    """
    k = pl.program_id(1)

    @pl.when(k == 0)
    def _():
        acc_ref[...] = jnp.zeros_like(acc_ref)

    # Partial backbone matmul: bf16 MXU inputs, f32 accumulation across K tiles.
    acc_ref[...] += jnp.dot(x_ref[...], wt_ref[...],
                            preferred_element_type=jnp.float32)

    @pl.when(k == pl.num_programs(1) - 1)
    def _():
        # Backbone epilogue (bias + ReLU in f32), then resnet.fc.
        h = jnp.maximum(acc_ref[...] + bt_ref[...], 0.0)
        y = jnp.dot(h.astype(jnp.bfloat16), wf_ref[...],
                    preferred_element_type=jnp.float32)
        o_ref[...] = y + bf_ref[...]


# ------------------------------ wrapper --------------------------------------

def rotation_encoder_forward(params, img):
    """RotationEncoder.forward: img [B,C,H,W] -> features [B, feature_dim]."""
    B = img.shape[0]
    # Cast to bf16 BEFORE padding: halves the streamed bytes and the pad copy.
    x = img.reshape(B, -1).astype(jnp.bfloat16)
    K = x.shape[1]

    D = BACKBONE_DIM
    N_pad = params["fc_w"].shape[1]                 # feature_dim rounded to 128
    TK, K_pad = _k_tiling(K)
    assert params["trunk_w"].shape[0] == K_pad      # init used the same tiling
    TB, B_pad = _batch_tiling(B)

    # Single fused pad (zeros) for both batch sublanes and K lanes.
    if (B_pad, K_pad) != (B, K):
        x = jnp.pad(x, ((0, B_pad - B), (0, K_pad - K)))

    # VMEM budget: double-buffered streamed/constant tiles + accumulator.
    vmem_bytes = (2 * TB * TK * 2            # x (bf16)
                  + 2 * TK * D * 2           # trunk_w K-slice (bf16)
                  + 2 * D * N_pad * 2        # fc_w (bf16)
                  + 2 * 8 * (D + N_pad) * 4  # biases (f32, sublane padded)
                  + 2 * TB * N_pad * 4       # output (f32)
                  + TB * D * 4)              # accumulator scratch (f32)
    vmem_limit = int(min(max(2 * vmem_bytes, 16 * 2**20), 64 * 2**20))

    cost = pl.CostEstimate(
        flops=2 * B_pad * K_pad * D + 2 * B_pad * D * N_pad,
        transcendentals=0,
        bytes_accessed=int(B_pad * K_pad * 2 + K_pad * D * 2 + D * N_pad * 2
                           + (D + N_pad) * 4 + B_pad * N_pad * 4),
    )

    out = pl.pallas_call(
        _rotation_encoder_kernel,
        out_shape=jax.ShapeDtypeStruct((B_pad, N_pad), jnp.float32),
        grid=(B_pad // TB, K_pad // TK),
        in_specs=[
            pl.BlockSpec((TB, TK), lambda i, k: (i, k)),    # x (batch & K tiled)
            pl.BlockSpec((TK, D), lambda i, k: (k, 0)),     # trunk W (K tiled)
            pl.BlockSpec((1, D), lambda i, k: (0, 0)),      # trunk b (resident)
            pl.BlockSpec((D, N_pad), lambda i, k: (0, 0)),  # fc W (resident)
            pl.BlockSpec((1, N_pad), lambda i, k: (0, 0)),  # fc b (resident)
        ],
        out_specs=pl.BlockSpec((TB, N_pad), lambda i, k: (i, 0)),
        scratch_shapes=[pltpu.VMEM((TB, D), jnp.float32)],  # K-reduction acc
        compiler_params=pltpu.CompilerParams(
            dimension_semantics=("parallel", "arbitrary"),
            vmem_limit_bytes=vmem_limit,
        ),
        cost_estimate=cost,
    )(x, params["trunk_w"], params["trunk_b"], params["fc_w"], params["fc_b"])

    # Strip batch/lane padding.
    return out[:B, :params["feature_dim"]]


# ------------------------------ parameters -----------------------------------

def init_params(key, in_flat, feature_dim):
    """Deterministic synthetic parameters.  Weights stored [in, out] in bf16."""
    k1, k2, k3, k4 = jax.random.split(key, 4)
    _, in_pad = _k_tiling(in_flat)
    feat_pad = _round_up(feature_dim, LANE)

    # TODO(synk): the pretrained resnet18 conv trunk (conv/BN/pool residual
    # stages + global average pool) has no clean toy-scale Pallas equivalent;
    # it is represented by this single frozen Linear(+ReLU) producing the
    # 512-d backbone feature vector.
    wt = 0.05 * jax.random.normal(k1, (in_flat, BACKBONE_DIM), jnp.float32)
    wt = jnp.pad(wt, ((0, in_pad - in_flat), (0, 0)))       # zero rows for K pad
    bt = 0.01 * jax.random.normal(k2, (1, BACKBONE_DIM), jnp.float32)

    # resnet.fc = nn.Linear(512, feature_dim); columns zero-padded to 128 lanes.
    wf = 0.05 * jax.random.normal(k3, (BACKBONE_DIM, feature_dim), jnp.float32)
    wf = jnp.pad(wf, ((0, 0), (0, feat_pad - feature_dim)))
    bf = jnp.zeros((1, feat_pad), jnp.float32)
    bf = bf.at[:, :feature_dim].set(
        0.01 * jax.random.normal(k4, (1, feature_dim), jnp.float32))

    return {
        "trunk_w": wt.astype(jnp.bfloat16),
        "trunk_b": bt,
        "fc_w": wf.astype(jnp.bfloat16),
        "fc_b": bf,
        "feature_dim": feature_dim,
    }


# ------------------------------ reference (pure JAX) --------------------------

def _ref_forward(params, img):
    B = img.shape[0]
    x = img.reshape(B, -1).astype(jnp.float32)
    K_pad = params["trunk_w"].shape[0]
    if K_pad != x.shape[1]:
        x = jnp.pad(x, ((0, 0), (0, K_pad - x.shape[1])))
    # Mirror the kernel's bf16 MXU inputs (f32 accumulation).
    xb = x.astype(jnp.bfloat16).astype(jnp.float32)
    wt = params["trunk_w"].astype(jnp.float32)
    wf = params["fc_w"].astype(jnp.float32)
    h = jnp.maximum(xb @ wt + params["trunk_b"], 0.0)
    hb = h.astype(jnp.bfloat16).astype(jnp.float32)
    y = hb @ wf + params["fc_b"]
    return y[:, :params["feature_dim"]]


# ------------------------------ main ------------------------------------------

if __name__ == "__main__":
    B, C, H, W = 2, 4, 16, 16          # small NCHW image batch
    feature_dim = 32                   # RotationEncoder default

    key = jax.random.PRNGKey(0)
    k_img, k_par = jax.random.split(key)
    img = jax.random.normal(k_img, (B, C, H, W), jnp.float32)
    params = init_params(k_par, C * H * W, feature_dim)

    feats = rotation_encoder_forward(params, img)
    feats = jax.block_until_ready(feats)

    feats_ref = _ref_forward(params, img)
    assert feats.shape == (B, feature_dim)
    # bf16 MXU inputs (f32 accumulation) -> tolerances relaxed vs pure-f32 math.
    assert jnp.allclose(feats, feats_ref, rtol=2e-2, atol=2e-2)

    print("KERNEL_OK")
</pallas_src>

<mosaic_0001>
module attributes {stable_mosaic.version = 11 : i64} {
  func.func @_rotation_encoder_kernel(%arg0: i32, %arg1: i32, %arg2: memref<16x512xbf16, #tpu.memory_space<vmem>>, %arg3: memref<512x512xbf16, #tpu.memory_space<vmem>>, %arg4: memref<1x512xf32, #tpu.memory_space<vmem>>, %arg5: memref<512x128xbf16, #tpu.memory_space<vmem>>, %arg6: memref<1x128xf32, #tpu.memory_space<vmem>>, %arg7: memref<16x128xf32, #tpu.memory_space<vmem>>, %arg8: memref<16x512xf32, #tpu.memory_space<vmem>>) attributes {dimension_semantics = [#tpu.dimension_semantics<parallel>, #tpu.dimension_semantics<arbitrary>], iteration_bounds = array<i64: 1, 2>, scalar_prefetch = 0 : i64, scratch_operands = 1 : i64, tpu.core_type = #tpu.core_type<tc>, window_params = [{transform_indices = @transform_0, window_bounds = array<i64: 16, 512>}, {transform_indices = @transform_1, window_bounds = array<i64: 512, 512>}, {pipeline_mode = #tpu.pipeline_mode<synchronous>, transform_indices = @transform_2, window_bounds = array<i64: 1, 512>}, {pipeline_mode = #tpu.pipeline_mode<synchronous>, transform_indices = @transform_3, window_bounds = array<i64: 512, 128>}, {pipeline_mode = #tpu.pipeline_mode<synchronous>, transform_indices = @transform_4, window_bounds = array<i64: 1, 128>}, {transform_indices = @transform_5, window_bounds = array<i64: 16, 128>}]} {
    %c0_i32 = arith.constant 0 : i32
    %0 = arith.cmpi eq, %arg1, %c0_i32 : i32
    %1 = arith.extui %0 : i1 to i32
    %c0_i32_0 = arith.constant 0 : i32
    %2 = arith.cmpi ne, %1, %c0_i32_0 : i32
    scf.if %2 {
      %cst_9 = arith.constant 0.000000e+00 : f32
      %12 = vector.broadcast %cst_9 : f32 to vector<16x512xf32>
      %c0_10 = arith.constant 0 : index
      %c0_11 = arith.constant 0 : index
      %13 = vector.load %arg8[%c0_10, %c0_11] : memref<16x512xf32, #tpu.memory_space<vmem>>, vector<16x512xf32>
      tpu.vector_store %arg8[%c0_10, %c0_11], %12 {strides = array<i32>} : memref<16x512xf32, #tpu.memory_space<vmem>>, vector<16x512xf32>,
    } else {
    }
    %c0 = arith.constant 0 : index
    %c0_1 = arith.constant 0 : index
    %3 = vector.load %arg8[%c0, %c0_1] : memref<16x512xf32, #tpu.memory_space<vmem>>, vector<16x512xf32>
    %c0_2 = arith.constant 0 : index
    %c0_3 = arith.constant 0 : index
    %4 = vector.load %arg2[%c0_2, %c0_3] : memref<16x512xbf16, #tpu.memory_space<vmem>>, vector<16x512xbf16>
    %c0_4 = arith.constant 0 : index
    %c0_5 = arith.constant 0 : index
    %5 = vector.load %arg3[%c0_4, %c0_5] : memref<512x512xbf16, #tpu.memory_space<vmem>>, vector<512x512xbf16>
    %cst = arith.constant dense<0.000000e+00> : vector<16x512xf32>
    %6 = tpu.matmul %4, %5, %cst {dimension_numbers = #tpu.dot_dimension_numbers<[1], [0], [0], [1], [0, 0, 1, 1], [], []>} : vector<16x512xbf16>, vector<512x512xbf16>, vector<16x512xf32> -> vector<16x512xf32>
    %7 = arith.addf %3, %6 : vector<16x512xf32>
    %c0_6 = arith.constant 0 : index
    %c0_7 = arith.constant 0 : index
    %8 = vector.load %arg8[%c0_6, %c0_7] : memref<16x512xf32, #tpu.memory_space<vmem>>, vector<16x512xf32>
    tpu.vector_store %arg8[%c0_6, %c0_7], %7 {strides = array<i32>} : memref<16x512xf32, #tpu.memory_space<vmem>>, vector<16x512xf32>,
    %c1_i32 = arith.constant 1 : i32
    %9 = arith.cmpi eq, %arg1, %c1_i32 : i32
    %10 = arith.extui %9 : i1 to i32
    %c0_i32_8 = arith.constant 0 : i32
    %11 = arith.cmpi ne, %10, %c0_i32_8 : i32
    scf.if %11 {
      %c0_9 = arith.constant 0 : index
      %c0_10 = arith.constant 0 : index
      %12 = vector.load %arg8[%c0_9, %c0_10] : memref<16x512xf32, #tpu.memory_space<vmem>>, vector<16x512xf32>
      %c0_11 = arith.constant 0 : index
      %c0_12 = arith.constant 0 : index
      %13 = vector.load %arg4[%c0_11, %c0_12] : memref<1x512xf32, #tpu.memory_space<vmem>>, vector<1x512xf32>
      %14 = vector.broadcast %13 : vector<1x512xf32> to vector<16x512xf32>
      %15 = arith.addf %12, %14 : vector<16x512xf32>
      %cst_13 = arith.constant 0.000000e+00 : f32
      %16 = vector.broadcast %cst_13 : f32 to vector<16x512xf32>
      %17 = arith.maximumf %15, %16 : vector<16x512xf32>
      %18 = arith.truncf %17 : vector<16x512xf32> to vector<16x512xbf16>
      %c0_14 = arith.constant 0 : index
      %c0_15 = arith.constant 0 : index
      %19 = vector.load %arg5[%c0_14, %c0_15] : memref<512x128xbf16, #tpu.memory_space<vmem>>, vector<512x128xbf16>
      %cst_16 = arith.constant dense<0.000000e+00> : vector<16x128xf32>
      %20 = tpu.matmul %18, %19, %cst_16 {dimension_numbers = #tpu.dot_dimension_numbers<[1], [0], [0], [1], [0, 0, 1, 1], [], []>} : vector<16x512xbf16>, vector<512x128xbf16>, vector<16x128xf32> -> vector<16x128xf32>
      %c0_17 = arith.constant 0 : index
      %c0_18 = arith.constant 0 : index
      %21 = vector.load %arg6[%c0_17, %c0_18] : memref<1x128xf32, #tpu.memory_space<vmem>>, vector<1x128xf32>
      %22 = vector.broadcast %21 : vector<1x128xf32> to vector<16x128xf32>
      %23 = arith.addf %20, %22 : vector<16x128xf32>
      %c0_19 = arith.constant 0 : index
      %c0_20 = arith.constant 0 : index
      %24 = vector.load %arg7[%c0_19, %c0_20] : memref<16x128xf32, #tpu.memory_space<vmem>>, vector<16x128xf32>
      tpu.vector_store %arg7[%c0_19, %c0_20], %23 {strides = array<i32>} : memref<16x128xf32, #tpu.memory_space<vmem>>, vector<16x128xf32>,
    } else {
    }
    return
  }
  func.func @transform_0(%arg0: i32, %arg1: i32) -> (i32, i32) {
    %c0_i32 = arith.constant 0 : i32
    return %arg0, %arg1 : i32, i32
  }
  func.func @transform_1(%arg0: i32, %arg1: i32) -> (i32, i32) {
    %c0_i32 = arith.constant 0 : i32
    %c0_i32_0 = arith.constant 0 : i32
    return %arg1, %c0_i32 : i32, i32
  }
  func.func @transform_2(%arg0: i32, %arg1: i32) -> (i32, i32) {
    %c0_i32 = arith.constant 0 : i32
    %c0_i32_0 = arith.constant 0 : i32
    %c0_i32_1 = arith.constant 0 : i32
    return %c0_i32, %c0_i32_0 : i32, i32
  }
  func.func @transform_3(%arg0: i32, %arg1: i32) -> (i32, i32) {
    %c0_i32 = arith.constant 0 : i32
    %c0_i32_0 = arith.constant 0 : i32
    %c0_i32_1 = arith.constant 0 : i32
    return %c0_i32, %c0_i32_0 : i32, i32
  }
  func.func @transform_4(%arg0: i32, %arg1: i32) -> (i32, i32) {
    %c0_i32 = arith.constant 0 : i32
    %c0_i32_0 = arith.constant 0 : i32
    %c0_i32_1 = arith.constant 0 : i32
    return %c0_i32, %c0_i32_0 : i32, i32
  }
  func.func @transform_5(%arg0: i32, %arg1: i32) -> (i32, i32) {
    %c0_i32 = arith.constant 0 : i32
    %c0_i32_0 = arith.constant 0 : i32
    return %arg0, %c0_i32 : i32, i32
  }
}

</mosaic_0001>

<llo_original>
// kernel: tpu_custom_call.1
$region0: #{tpu_custom_call.1}
  #allocation0 [shape = 'u32[]', space=smem, size = 0x4, offset = 0x4, fixed_abs, tag = 'smem constant byte address 0x4 - core index']
  #allocation1 [shape = 'u32[144,128]{1,0:T(1,128)}', space=vmem, size = 0x12000, scoped, tag = 'internal scratch']
  #allocation2 [shape = 'f32[16,512]{1,0:T(8,128)}', space=vmem, size = 0x8000, scoped, tag = 'scratch operand']
  %s0 = inlined_call_operand.hbm [shape: bf16[16,1024], index: 0, kind: input, shape index: {}]
  %s1 = inlined_call_operand.hbm [shape: bf16[1024,512], index: 1, kind: input, shape index: {}]
  %s2 = inlined_call_operand.hbm [shape: f32[1,512], index: 2, kind: input, shape index: {}]
  %s3 = inlined_call_operand.hbm [shape: bf16[512,128], index: 3, kind: input, shape index: {}]
  %s4 = inlined_call_operand.vmem [shape: f32[1,128], index: 4, kind: input, shape index: {}]
  %s5 = inlined_call_operand.hbm [shape: f32[16,128], index: 5, kind: output, shape index: {}]
  %s6 = sld [smem:[#allocation0]]
  $region77: #{tpu_custom_call.1} parent=0
    _
  %s8 = ssub.s32 1, %s6
  %s9 = scalar_select 0, %s8, %s6
  $region1: #{tpu_custom_call.1} parent=0
    #allocation3 [shape = 'u8[32768]{0}', space=vmem, size = 0x8000, scoped, tag = 'input window, operand 0']
    #allocation4 [shape = 's32[2]{0}', space=sflag, size = 0x8, scoped, tag = 'scoped memory for tpu_custom_call.1']
    #allocation5 [shape = 's32[2]{0}', space=sflag, size = 0x8, scoped, tag = 'scoped memory for tpu_custom_call.1']
    #allocation6 [shape = 'u8[1048576]{0}', space=vmem, size = 0x100000, scoped, tag = 'input window, operand 1']
    #allocation7 [shape = 's32[2]{0}', space=sflag, size = 0x8, scoped, tag = 'scoped memory for tpu_custom_call.1']
    #allocation8 [shape = 'u8[2048]{0}', space=vmem, size = 0x800, scoped, tag = 'input window, operand 2, single buffered']
    #allocation9 [shape = 'u8[131072]{0}', space=vmem, size = 0x20000, scoped, tag = 'input window, operand 3, single buffered']
    #allocation10 [shape = 's32[1]{0}', space=sflag, size = 0x4, scoped, tag = 'scoped memory for tpu_custom_call.1']
    #allocation11 [shape = 'u8[8192]{0}', space=vmem, size = 0x2000, scoped, tag = 'output window, operand 0, single buffered']
    %10 = vsyncpa [#allocation4], 0
    %s11 = scalar_lea.sflag [#allocation4], 1
    %12 = vsyncpa %s11, 0
    %13 = vsyncpa [#allocation7], 0
    %s14 = scalar_lea.sflag [#allocation7], 1
    %15 = vsyncpa %s14, 0
    %16 = vsyncpa [#allocation10], 0
    %17 = vsyncpa [#allocation5], 0
    loop: start=0, step=1, limit=4
    $region2: #{tpu_custom_call.1} parent=1 // loop_pre_header
      _
    $region3: #{tpu_custom_call.1} parent=1 // loop_header
      %s19 = sphi 0, %s23
      %p20 = scmp.ge.s32.totalorder %s19, 4
      %s26 = sphi 0, %s38
      %s27 = sphi 0, %s34
      %s28 = sphi 0, %s26
      %s29 = sphi 0, %s27
      %s30 = sphi 0, %s28
      %s31 = sphi 0, %s29
      %s43 = sphi 0, %s45
      %s46 = sphi 0, %s43
      %s47 = sphi 0, %s46
      %s63 = sphi 0, %s47
      %s69 = sphi 0, %s71
      %s72 = sphi 0, %s69
      %s73 = sphi 0, %s72
      %s89 = sphi 0, %s73
      %s93 = sphi 0, %s93
      %s95 = sphi 0, %s93
      %s96 = sphi 0, %s95
      %s110 = sphi 0, %s96
      %s114 = sphi 0, %s114
      %s116 = sphi 0, %s114
      %s117 = sphi 0, %s116
      %s131 = sphi 0, %s117
      %s135 = sphi 0, %s135
      %s137 = sphi 0, %s135
      %s138 = sphi 0, %s137
      %s152 = sphi 0, %s138
      %s158 = sphi 0, %s160
      %s161 = sphi 0, %s158
      %s162 = sphi 0, %s161
      %s178 = sphi 0, %s162
    $region4: #{tpu_custom_call.1} parent=1 // loop_header_branch
      %22 = sbr.rel (%p20) target = $region8
    $region5: #{tpu_custom_call.1} parent=1 // loop_body
      %s24 = ssub.s32 %s19, 1
      %s25 = ssub.s32 %s19, 2
      %s32 = sadd.s32 1, %s27
      %p33 = scmp.ge.s32.totalorder %s32, 2
      %s34 = scalar_select %p33, 0, %s32
      %s35 = sadd.s32 1, %s26
      %s36 = scalar_select %p33, %s35, %s26
      %p37 = scmp.ge.s32.totalorder %s36, 1
      %s38 = scalar_select %p37, 0, %s36
      %s39 = ssub.s32 %s26, %s38
      %s40 = ssub.s32 %s27, %s34
      %s41 = sor.u32 %s39, %s40
      %p42 = scmp.eq.s32.totalorder %s41, 0
      %s44 = sadd.s32 %s43, 1
      %s45 = scalar_select %p42, %s43, %s44
      %p48 = pneg %p42
      %p49 = scmp.eq.s32.totalorder %s19, 1
      %p50 = por %p48, %p49
      %p51 = scmp.ne.s32.totalorder %s43, %s46
      %p52 = scmp.eq.s32.totalorder %s19, 0
      %p53 = por %p51, %p52
      %p54 = scmp.ne.s32.totalorder %s43, %s46
      %p55 = scmp.eq.s32.totalorder %s24, 1
      %p56 = por %p54, %p55
      %p57 = scmp.ne.s32.totalorder %s46, %s47
      %p58 = scmp.eq.s32.totalorder %s24, 0
      %p59 = por %p57, %p58
      %p60 = scmp.ne.s32.totalorder %s46, %s47
      %p61 = scmp.eq.s32.totalorder %s25, 1
      %p62 = por %p60, %p61
      %p64 = scmp.ne.s32.totalorder %s47, %s63
      %p65 = scmp.eq.s32.totalorder %s25, 0
      %p66 = por %p64, %p65
      %s67 = ssub.s32 %s27, %s34
      %p68 = scmp.eq.s32.totalorder %s67, 0
      %s70 = sadd.s32 %s69, 1
      %s71 = scalar_select %p68, %s69, %s70
      %p74 = pneg %p68
      %p75 = scmp.eq.s32.totalorder %s19, 1
      %p76 = por %p74, %p75
      %p77 = scmp.ne.s32.totalorder %s69, %s72
      %p78 = scmp.eq.s32.totalorder %s19, 0
      %p79 = por %p77, %p78
      %p80 = scmp.ne.s32.totalorder %s69, %s72
      %p81 = scmp.eq.s32.totalorder %s24, 1
      %p82 = por %p80, %p81
      %p83 = scmp.ne.s32.totalorder %s72, %s73
      %p84 = scmp.eq.s32.totalorder %s24, 0
      %p85 = por %p83, %p84
      %p86 = scmp.ne.s32.totalorder %s72, %s73
      %p87 = scmp.eq.s32.totalorder %s25, 1
      %p88 = por %p86, %p87
      %p90 = scmp.ne.s32.totalorder %s73, %s89
      %p91 = scmp.eq.s32.totalorder %s25, 0
      %p92 = por %p90, %p91
      %s94 = sadd.s32 %s93, 1
      %p97 = scmp.eq.s32.totalorder %s19, 1
      %p98 = scmp.ne.s32.totalorder %s93, %s95
      %p99 = scmp.eq.s32.totalorder %s19, 0
      %p100 = por %p98, %p99
      %p101 = scmp.ne.s32.totalorder %s93, %s95
      %p102 = scmp.eq.s32.totalorder %s24, 1
      %p103 = por %p101, %p102
      %p104 = scmp.ne.s32.totalorder %s95, %s96
      %p105 = scmp.eq.s32.totalorder %s24, 0
      %p106 = por %p104, %p105
      %p107 = scmp.ne.s32.totalorder %s95, %s96
      %p108 = scmp.eq.s32.totalorder %s25, 1
      %p109 = por %p107, %p108
      %p111 = scmp.ne.s32.totalorder %s96, %s110
      %p112 = scmp.eq.s32.totalorder %s25, 0
      %p113 = por %p111, %p112
      %s115 = sadd.s32 %s114, 1
      %p118 = scmp.eq.s32.totalorder %s19, 1
      %p119 = scmp.ne.s32.totalorder %s114, %s116
      %p120 = scmp.eq.s32.totalorder %s19, 0
      %p121 = por %p119, %p120
      %p122 = scmp.ne.s32.totalorder %s114, %s116
      %p123 = scmp.eq.s32.totalorder %s24, 1
      %p124 = por %p122, %p123
      %p125 = scmp.ne.s32.totalorder %s116, %s117
      %p126 = scmp.eq.s32.totalorder %s24, 0
      %p127 = por %p125, %p126
      %p128 = scmp.ne.s32.totalorder %s116, %s117
      %p129 = scmp.eq.s32.totalorder %s25, 1
      %p130 = por %p128, %p129
      %p132 = scmp.ne.s32.totalorder %s117, %s131
      %p133 = scmp.eq.s32.totalorder %s25, 0
      %p134 = por %p132, %p133
      %s136 = sadd.s32 %s135, 1
      %p139 = scmp.eq.s32.totalorder %s19, 1
      %p140 = scmp.ne.s32.totalorder %s135, %s137
      %p141 = scmp.eq.s32.totalorder %s19, 0
      %p142 = por %p140, %p141
      %p143 = scmp.ne.s32.totalorder %s135, %s137
      %p144 = scmp.eq.s32.totalorder %s24, 1
      %p145 = por %p143, %p144
      %p146 = scmp.ne.s32.totalorder %s137, %s138
      %p147 = scmp.eq.s32.totalorder %s24, 0
      %p148 = por %p146, %p147
      %p149 = scmp.ne.s32.totalorder %s137, %s138
      %p150 = scmp.eq.s32.totalorder %s25, 1
      %p151 = por %p149, %p150
      %p153 = scmp.ne.s32.totalorder %s138, %s152
      %p154 = scmp.eq.s32.totalorder %s25, 0
      %p155 = por %p153, %p154
      %s156 = ssub.s32 %s26, %s38
      %p157 = scmp.eq.s32.totalorder %s156, 0
      %s159 = sadd.s32 %s158, 1
      %s160 = scalar_select %p157, %s158, %s159
      %p163 = pneg %p157
      %p164 = scmp.eq.s32.totalorder %s19, 1
      %p165 = por %p163, %p164
      %p166 = scmp.ne.s32.totalorder %s158, %s161
      %p167 = scmp.eq.s32.totalorder %s19, 0
      %p168 = por %p166, %p167
      %p169 = scmp.ne.s32.totalorder %s158, %s161
      %p170 = scmp.eq.s32.totalorder %s24, 1
      %p171 = por %p169, %p170
      %p172 = scmp.ne.s32.totalorder %s161, %s162
      %p173 = scmp.eq.s32.totalorder %s24, 0
      %p174 = por %p172, %p173
      %p175 = scmp.ne.s32.totalorder %s161, %s162
      %p176 = scmp.eq.s32.totalorder %s25, 1
      %p177 = por %p175, %p176
      %p179 = scmp.ne.s32.totalorder %s162, %s178
      %p180 = scmp.eq.s32.totalorder %s25, 0
      %p181 = por %p179, %p180
      %p182 = scmp.le.s32.totalorder 1, %s19
      %p183 = scmp.lt.s32.totalorder %s19, 3
      %p184 = pnand %p182, %p183
      %p185 = pneg %p184
      // Predicated region
      $region9: #{tpu_custom_call.1} parent=5 // pred_check
        _
      $region10: #{tpu_custom_call.1} parent=5 // pred_check_branch
        %187 = sbr.rel (%p184) target = $region12
      $region11: #{tpu_custom_call.1} parent=5 // pred_region
        %s188 = ssub.s32 %s19, 1
        // Predicated region
        $region13: #{tpu_custom_call.1} parent=11 // pred_check
          %p189 = pneg %p106
        $region14: #{tpu_custom_call.1} parent=11 // pred_check_branch
          %191 = sbr.rel (%p189) target = $region16
        $region15: #{tpu_custom_call.1} parent=11 // pred_region
          %s193 = ssub.s32 64, 64
          %194 = vsyncadd [#allocation7], %s193
          %s196 = sshll.u32 [#allocation8], 4
          %s197 = int_to_ptr.vmem [resolvable:$true] %s196
          %199 = dma.hbm_to_vmem [thread:$0]  %s2, 64, %s197, [#allocation7]
        $region16: #{tpu_custom_call.1} parent=11 // pred_fallthru
          _
        // Predicated region
        $region17: #{tpu_custom_call.1} parent=11 // pred_check
          %p200 = pneg %p127
        $region18: #{tpu_custom_call.1} parent=11 // pred_check_branch
          %202 = sbr.rel (%p200) target = $region20
        $region19: #{tpu_custom_call.1} parent=11 // pred_region
          %s204 = ssub.s32 4096, 4096
          %205 = vsyncadd [#allocation10], %s204
          %s206 = sshll.u32 [#allocation9], 4
          %s207 = int_to_ptr.vmem [resolvable:$true] %s206
          %212 = dma.hbm_to_vmem [thread:$0]  %s3, 4096, %s207, [#allocation10], 64, 64, 4
        $region20: #{tpu_custom_call.1} parent=11 // pred_fallthru
          _
        // Predicated region
        $region21: #{tpu_custom_call.1} parent=11 // pred_check
          %p213 = pneg %p148
        $region22: #{tpu_custom_call.1} parent=11 // pred_check_branch
          %215 = sbr.rel (%p213) target = $region24
        $region23: #{tpu_custom_call.1} parent=11 // pred_region
          _
        $region24: #{tpu_custom_call.1} parent=11 // pred_fallthru
          _
      $region12: #{tpu_custom_call.1} parent=5 // pred_fallthru
        _
      %p216 = scmp.lt.s32.totalorder %s19, 2
      // Predicated region
      $region25: #{tpu_custom_call.1} parent=5 // pred_check
        %p217 = pneg %p216
      $region26: #{tpu_custom_call.1} parent=5 // pred_check_branch
        %219 = sbr.rel (%p217) target = $region28
      $region27: #{tpu_custom_call.1} parent=5 // pred_region
        // Predicated region
        $region29: #{tpu_custom_call.1} parent=27 // pred_check
          %p220 = pneg %p53
        $region30: #{tpu_custom_call.1} parent=27 // pred_check_branch
          %222 = sbr.rel (%p220) target = $region32
        $region31: #{tpu_custom_call.1} parent=27 // pred_region
          %s223 = sand.u32 %s43, 1
          %s224 = scalar_lea.sflag [#allocation4], %s223
          %s225 = sand.u32 %s43, 1
          %s226 = smul.addr %s225, 32
          %s227 = scalar_lea.vmem [#allocation3], %s226
          %s228 = smul.u32 2, %s26
          %s229 = smul.u32 4, %s27
          %s231 = ssub.s32 512, 512
          %232 = vsyncadd %s224, %s231
          %s233 = smul.addr %s228, 8
          %s234 = sadd.s32 %s229, %s233
          %s235 = smul.addr %s234, 64
          %s236 = scalar_lea.hbm %s0, %s235
          %s237 = sshll.u32 %s227, 4
          %s238 = int_to_ptr.vmem [resolvable:$true] %s237
          %243 = dma.hbm_to_vmem [thread:$0]  %s236, 512, %s238, %s224, 512, 256, 16
        $region32: #{tpu_custom_call.1} parent=27 // pred_fallthru
          _
        // Predicated region
        $region33: #{tpu_custom_call.1} parent=27 // pred_check
          %p244 = pneg %p79
        $region34: #{tpu_custom_call.1} parent=27 // pred_check_branch
          %246 = sbr.rel (%p244) target = $region36
        $region35: #{tpu_custom_call.1} parent=27 // pred_region
          %s247 = sand.u32 %s19, 1
          %s248 = scalar_lea.sflag [#allocation7], %s247
          %s249 = sand.u32 %s69, 1
          %s250 = smul.addr %s249, 1024
          %s251 = scalar_lea.vmem [#allocation6], %s250
          %s252 = smul.u32 64, %s27
          %s254 = ssub.s32 16384, 16384
          %255 = vsyncadd %s248, %s254
          %s256 = smul.addr %s252, 4
          %s257 = smul.addr %s256, 64
          %s258 = scalar_lea.hbm %s1, %s257
          %s259 = sshll.u32 %s251, 4
          %s260 = int_to_ptr.vmem [resolvable:$true] %s259
          %265 = dma.hbm_to_vmem [thread:$0]  %s258, 16384, %s260, %s248, 256, 256, 16
        $region36: #{tpu_custom_call.1} parent=27 // pred_fallthru
          _
      $region28: #{tpu_custom_call.1} parent=5 // pred_fallthru
        _
      %p266 = scmp.le.s32.totalorder 1, %s19
      %p267 = scmp.lt.s32.totalorder %s19, 3
      %p268 = pnand %p266, %p267
      %p269 = pneg %p268
      // Predicated region
      $region37: #{tpu_custom_call.1} parent=5 // pred_check
        _
      $region38: #{tpu_custom_call.1} parent=5 // pred_check_branch
        %271 = sbr.rel (%p268) target = $region40
      $region39: #{tpu_custom_call.1} parent=5 // pred_region
        %s272 = ssub.s32 %s19, 1
        %s273 = sand.u32 %s46, 1
        %s274 = scalar_lea.sflag [#allocation4], %s273
        %s275 = sand.u32 %s46, 1
        %s276 = smul.addr %s275, 32
        %s277 = scalar_lea.vmem [#allocation3], %s276
        // Predicated region
        $region41: #{tpu_custom_call.1} parent=39 // pred_check
          %p278 = pneg %p59
        $region42: #{tpu_custom_call.1} parent=39 // pred_check_branch
          %280 = sbr.rel (%p278) target = $region44
        $region43: #{tpu_custom_call.1} parent=39 // pred_region
          %281 = dma.done %s274, 512
        $region44: #{tpu_custom_call.1} parent=39 // pred_fallthru
          _
        %s282 = sand.u32 %s24, 1
        %s283 = scalar_lea.sflag [#allocation7], %s282
        %s284 = sand.u32 %s72, 1
        %s285 = smul.addr %s284, 1024
        %s286 = scalar_lea.vmem [#allocation6], %s285
        // Predicated region
        $region45: #{tpu_custom_call.1} parent=39 // pred_check
          %p287 = pneg %p85
        $region46: #{tpu_custom_call.1} parent=39 // pred_check_branch
          %289 = sbr.rel (%p287) target = $region48
        $region47: #{tpu_custom_call.1} parent=39 // pred_region
          %290 = dma.done %s283, 16384
        $region48: #{tpu_custom_call.1} parent=39 // pred_fallthru
          _
        // Predicated region
        $region49: #{tpu_custom_call.1} parent=39 // pred_check
          %p291 = pneg %p106
        $region50: #{tpu_custom_call.1} parent=39 // pred_check_branch
          %293 = sbr.rel (%p291) target = $region52
        $region51: #{tpu_custom_call.1} parent=39 // pred_region
          %294 = dma.done [#allocation7], 64
        $region52: #{tpu_custom_call.1} parent=39 // pred_fallthru
          _
        // Predicated region
        $region53: #{tpu_custom_call.1} parent=39 // pred_check
          %p295 = pneg %p127
        $region54: #{tpu_custom_call.1} parent=39 // pred_check_branch
          %297 = sbr.rel (%p295) target = $region56
        $region55: #{tpu_custom_call.1} parent=39 // pred_region
          %298 = dma.done [#allocation10], 4096
        $region56: #{tpu_custom_call.1} parent=39 // pred_fallthru
          _
        %s299 = sand.u32 %s46, 1
        %s300 = scalar_lea.sflag [#allocation4], %s299
        %s301 = sand.u32 %s46, 1
        %s302 = smul.addr %s301, 32
        %s303 = scalar_lea.vmem [#allocation3], %s302
        %p304 = pneg %p59
        %p305 = pneg %p56
        %s306 = sand.u32 %s24, 1
        %s307 = scalar_lea.sflag [#allocation7], %s306
        %s308 = sand.u32 %s72, 1
        %s309 = smul.addr %s308, 1024
        %s310 = scalar_lea.vmem [#allocation6], %s309
        %p311 = pneg %p85
        %p312 = pneg %p82
        %p313 = pneg %p106
        %p314 = pneg %p103
        %p315 = pneg %p127
        %p316 = pneg %p124
        %p317 = pneg %p148
        %p318 = pneg %p145
        %p319 = pneg %p174
        %p320 = pneg %p171
        %s321 = smul.u32 2, %s28
        %s322 = smul.u32 4, %s29
        %s323 = smul.u32 64, %s29
        %s324 = smul.u32 2, %s28
        %p326 = scmp.eq.s32.totalorder %s29, 0
        // Predicated region
        $region57: #{tpu_custom_call.1} parent=39 // pred_check
          %p327 = pneg %p326
        $region58: #{tpu_custom_call.1} parent=39 // pred_check_branch
          %329 = sbr.rel (%p327) target = $region60
        $region59: #{tpu_custom_call.1} parent=39 // pred_region
          %330 = vst [vmem:[#allocation2] sm:$0xff] 0.0
          %331 = vst [vmem:[#allocation2 + $0x8] sm:$0xff] 0.0
          %332 = vst [vmem:[#allocation2 + $0x10] sm:$0xff] 0.0
          %333 = vst [vmem:[#allocation2 + $0x18] sm:$0xff] 0.0
          %334 = vst [vmem:[#allocation2 + $0x20] sm:$0xff] 0.0
          %335 = vst [vmem:[#allocation2 + $0x28] sm:$0xff] 0.0
          %336 = vst [vmem:[#allocation2 + $0x30] sm:$0xff] 0.0
          %337 = vst [vmem:[#allocation2 + $0x38] sm:$0xff] 0.0
        $region60: #{tpu_custom_call.1} parent=39 // pred_fallthru
          _
        %v338 = vld [vmem:[#allocation2] sm:$0xff]
        %v339 = vld [vmem:[#allocation2 + $0x8] sm:$0xff]
        %v340 = vld [vmem:[#allocation2 + $0x10] sm:$0xff]
        %v341 = vld [vmem:[#allocation2 + $0x18] sm:$0xff]
        %v342 = vld [vmem:[#allocation2 + $0x20] sm:$0xff]
        %v343 = vld [vmem:[#allocation2 + $0x28] sm:$0xff]
        %v344 = vld [vmem:[#allocation2 + $0x30] sm:$0xff]
        %v345 = vld [vmem:[#allocation2 + $0x38] sm:$0xff]
        %v346 = vld [vmem:[%s277] sm:$0xff]
        %v347 = vld [vmem:[%s277 + $0x8] sm:$0xff]
        %v348 = vld [vmem:[%s277 + $0x10] sm:$0xff]
        %v349 = vld [vmem:[%s277 + $0x18] sm:$0xff]
        %v350 = vld [vmem:[%s286] sm:$0xff]
        %v351 = vld [vmem:[%s286 + $0x8] sm:$0xff]
        %v352 = vld [vmem:[%s286 + $0x10] sm:$0xff]
        %v353 = vld [vmem:[%s286 + $0x18] sm:$0xff]
        %v354 = vld [vmem:[%s286 + $0x20] sm:$0xff]
        %v355 = vld [vmem:[%s286 + $0x28] sm:$0xff]
        %v356 = vld [vmem:[%s286 + $0x30] sm:$0xff]
        %v357 = vld [vmem:[%s286 + $0x38] sm:$0xff]
        %v358 = vld [vmem:[%s286 + $0x40] sm:$0xff]
        %v359 = vld [vmem:[%s286 + $0x48] sm:$0xff]
        %v360 = vld [vmem:[%s286 + $0x50] sm:$0xff]
        %v361 = vld [vmem:[%s286 + $0x58] sm:$0xff]
        %v362 = vld [vmem:[%s286 + $0x60] sm:$0xff]
        %v363 = vld [vmem:[%s286 + $0x68] sm:$0xff]
        %v364 = vld [vmem:[%s286 + $0x70] sm:$0xff]
        %v365 = vld [vmem:[%s286 + $0x78] sm:$0xff]
        %v366 = vld [vmem:[%s286 + $0x80] sm:$0xff]
        %v367 = vld [vmem:[%s286 + $0x88] sm:$0xff]
        %v368 = vld [vmem:[%s286 + $0x90] sm:$0xff]
        %v369 = vld [vmem:[%s286 + $0x98] sm:$0xff]
        %v370 = vld [vmem:[%s286 + $0xa0] sm:$0xff]
        %v371 = vld [vmem:[%s286 + $0xa8] sm:$0xff]
        %v372 = vld [vmem:[%s286 + $0xb0] sm:$0xff]
        %v373 = vld [vmem:[%s286 + $0xb8] sm:$0xff]
        %v374 = vld [vmem:[%s286 + $0xc0] sm:$0xff]
        %v375 = vld [vmem:[%s286 + $0xc8] sm:$0xff]
        %v376 = vld [vmem:[%s286 + $0xd0] sm:$0xff]
        %v377 = vld [vmem:[%s286 + $0xd8] sm:$0xff]
        %v378 = vld [vmem:[%s286 + $0xe0] sm:$0xff]
        %v379 = vld [vmem:[%s286 + $0xe8] sm:$0xff]
        %v380 = vld [vmem:[%s286 + $0xf0] sm:$0xff]
        %v381 = vld [vmem:[%s286 + $0xf8] sm:$0xff]
        %v382 = vld [vmem:[%s286 + $0x100] sm:$0xff]
        %v383 = vld [vmem:[%s286 + $0x108] sm:$0xff]
        %v384 = vld [vmem:[%s286 + $0x110] sm:$0xff]
        %v385 = vld [vmem:[%s286 + $0x118] sm:$0xff]
        %v386 = vld [vmem:[%s286 + $0x120] sm:$0xff]
        %v387 = vld [vmem:[%s286 + $0x128] sm:$0xff]
        %v388 = vld [vmem:[%s286 + $0x130] sm:$0xff]
        %v389 = vld [vmem:[%s286 + $0x138] sm:$0xff]
        %v390 = vld [vmem:[%s286 + $0x140] sm:$0xff]
        %v391 = vld [vmem:[%s286 + $0x148] sm:$0xff]
        %v392 = vld [vmem:[%s286 + $0x150] sm:$0xff]
        %v393 = vld [vmem:[%s286 + $0x158] sm:$0xff]
        %v394 = vld [vmem:[%s286 + $0x160] sm:$0xff]
        %v395 = vld [vmem:[%s286 + $0x168] sm:$0xff]
        %v396 = vld [vmem:[%s286 + $0x170] sm:$0xff]
        %v397 = vld [vmem:[%s286 + $0x178] sm:$0xff]
        %v398 = vld [vmem:[%s286 + $0x180] sm:$0xff]
        %v399 = vld [vmem:[%s286 + $0x188] sm:$0xff]
        %v400 = vld [vmem:[%s286 + $0x190] sm:$0xff]
        %v401 = vld [vmem:[%s286 + $0x198] sm:$0xff]
        %v402 = vld [vmem:[%s286 + $0x1a0] sm:$0xff]
        %v403 = vld [vmem:[%s286 + $0x1a8] sm:$0xff]
        %v404 = vld [vmem:[%s286 + $0x1b0] sm:$0xff]
        %v405 = vld [vmem:[%s286 + $0x1b8] sm:$0xff]
        %v406 = vld [vmem:[%s286 + $0x1c0] sm:$0xff]
        %v407 = vld [vmem:[%s286 + $0x1c8] sm:$0xff]
        %v408 = vld [vmem:[%s286 + $0x1d0] sm:$0xff]
        %v409 = vld [vmem:[%s286 + $0x1d8] sm:$0xff]
        %v410 = vld [vmem:[%s286 + $0x1e0] sm:$0xff]
        %v411 = vld [vmem:[%s286 + $0x1e8] sm:$0xff]
        %v412 = vld [vmem:[%s286 + $0x1f0] sm:$0xff]
        %v413 = vld [vmem:[%s286 + $0x1f8] sm:$0xff]
        %v414 = vld [vmem:[%s286 + $0x200] sm:$0xff]
        %v415 = vld [vmem:[%s286 + $0x208] sm:$0xff]
        %v416 = vld [vmem:[%s286 + $0x210] sm:$0xff]
        %v417 = vld [vmem:[%s286 + $0x218] sm:$0xff]
        %v418 = vld [vmem:[%s286 + $0x220] sm:$0xff]
        %v419 = vld [vmem:[%s286 + $0x228] sm:$0xff]
        %v420 = vld [vmem:[%s286 + $0x230] sm:$0xff]
        %v421 = vld [vmem:[%s286 + $0x238] sm:$0xff]
        %v422 = vld [vmem:[%s286 + $0x240] sm:$0xff]
        %v423 = vld [vmem:[%s286 + $0x248] sm:$0xff]
        %v424 = vld [vmem:[%s286 + $0x250] sm:$0xff]
        %v425 = vld [vmem:[%s286 + $0x258] sm:$0xff]
        %v426 = vld [vmem:[%s286 + $0x260] sm:$0xff]
        %v427 = vld [vmem:[%s286 + $0x268] sm:$0xff]
        %v428 = vld [vmem:[%s286 + $0x270] sm:$0xff]
        %v429 = vld [vmem:[%s286 + $0x278] sm:$0xff]
        %v430 = vld [vmem:[%s286 + $0x280] sm:$0xff]
        %v431 = vld [vmem:[%s286 + $0x288] sm:$0xff]
        %v432 = vld [vmem:[%s286 + $0x290] sm:$0xff]
        %v433 = vld [vmem:[%s286 + $0x298] sm:$0xff]
        %v434 = vld [vmem:[%s286 + $0x2a0] sm:$0xff]
        %v435 = vld [vmem:[%s286 + $0x2a8] sm:$0xff]
        %v436 = vld [vmem:[%s286 + $0x2b0] sm:$0xff]
        %v437 = vld [vmem:[%s286 + $0x2b8] sm:$0xff]
        %v438 = vld [vmem:[%s286 + $0x2c0] sm:$0xff]
        %v439 = vld [vmem:[%s286 + $0x2c8] sm:$0xff]
        %v440 = vld [vmem:[%s286 + $0x2d0] sm:$0xff]
        %v441 = vld [vmem:[%s286 + $0x2d8] sm:$0xff]
        %v442 = vld [vmem:[%s286 + $0x2e0] sm:$0xff]
        %v443 = vld [vmem:[%s286 + $0x2e8] sm:$0xff]
        %v444 = vld [vmem:[%s286 + $0x2f0] sm:$0xff]
        %v445 = vld [vmem:[%s286 + $0x2f8] sm:$0xff]
        %v446 = vld [vmem:[%s286 + $0x300] sm:$0xff]
        %v447 = vld [vmem:[%s286 + $0x308] sm:$0xff]
        %v448 = vld [vmem:[%s286 + $0x310] sm:$0xff]
        %v449 = vld [vmem:[%s286 + $0x318] sm:$0xff]
        %v450 = vld [vmem:[%s286 + $0x320] sm:$0xff]
        %v451 = vld [vmem:[%s286 + $0x328] sm:$0xff]
        %v452 = vld [vmem:[%s286 + $0x330] sm:$0xff]
        %v453 = vld [vmem:[%s286 + $0x338] sm:$0xff]
        %v454 = vld [vmem:[%s286 + $0x340] sm:$0xff]
        %v455 = vld [vmem:[%s286 + $0x348] sm:$0xff]
        %v456 = vld [vmem:[%s286 + $0x350] sm:$0xff]
        %v457 = vld [vmem:[%s286 + $0x358] sm:$0xff]
        %v458 = vld [vmem:[%s286 + $0x360] sm:$0xff]
        %v459 = vld [vmem:[%s286 + $0x368] sm:$0xff]
        %v460 = vld [vmem:[%s286 + $0x370] sm:$0xff]
        %v461 = vld [vmem:[%s286 + $0x378] sm:$0xff]
        %v462 = vld [vmem:[%s286 + $0x380] sm:$0xff]
        %v463 = vld [vmem:[%s286 + $0x388] sm:$0xff]
        %v464 = vld [vmem:[%s286 + $0x390] sm:$0xff]
        %v465 = vld [vmem:[%s286 + $0x398] sm:$0xff]
        %v466 = vld [vmem:[%s286 + $0x3a0] sm:$0xff]
        %v467 = vld [vmem:[%s286 + $0x3a8] sm:$0xff]
        %v468 = vld [vmem:[%s286 + $0x3b0] sm:$0xff]
        %v469 = vld [vmem:[%s286 + $0x3b8] sm:$0xff]
        %v470 = vld [vmem:[%s286 + $0x3c0] sm:$0xff]
        %v471 = vld [vmem:[%s286 + $0x3c8] sm:$0xff]
        %v472 = vld [vmem:[%s286 + $0x3d0] sm:$0xff]
        %v473 = vld [vmem:[%s286 + $0x3d8] sm:$0xff]
        %v474 = vld [vmem:[%s286 + $0x3e0] sm:$0xff]
        %v475 = vld [vmem:[%s286 + $0x3e8] sm:$0xff]
        %v476 = vld [vmem:[%s286 + $0x3f0] sm:$0xff]
        %v477 = vld [vmem:[%s286 + $0x3f8] sm:$0xff]
        %v482 = vunpack.c.l.b16 %v346
        %v483 = vunpack.c.h.b16 %v346
        %v484 = vunpack.c.l.b16 %v347
        %v485 = vunpack.c.h.b16 %v347
        %v486 = vunpack.c.l.b16 %v348
        %v487 = vunpack.c.h.b16 %v348
        %v488 = vunpack.c.l.b16 %v349
        %v489 = vunpack.c.h.b16 %v349
        %v490 = vpack.c.b16 %v486, %v482
        %v491 = vpack.c.b16 %v487, %v483
        %v492 = vpack.c.b16 %v488, %v484
        %v493 = vpack.c.b16 %v489, %v485
        %v626 = vunpack.c.l.b16 %v350
        %v627 = vunpack.c.h.b16 %v350
        %v628 = vunpack.c.l.b16 %v351
        %v629 = vunpack.c.h.b16 %v351
        %v630 = vunpack.c.l.b16 %v352
        %v631 = vunpack.c.h.b16 %v352
        %v632 = vunpack.c.l.b16 %v353
        %v633 = vunpack.c.h.b16 %v353
        %v634 = vunpack.c.l.b16 %v354
        %v635 = vunpack.c.h.b16 %v354
        %v636 = vunpack.c.l.b16 %v355
        %v637 = vunpack.c.h.b16 %v355
        %v638 = vunpack.c.l.b16 %v356
        %v639 = vunpack.c.h.b16 %v356
        %v640 = vunpack.c.l.b16 %v357
        %v641 = vunpack.c.h.b16 %v357
        %v642 = vunpack.c.l.b16 %v358
        %v643 = vunpack.c.h.b16 %v358
        %v644 = vunpack.c.l.b16 %v359
        %v645 = vunpack.c.h.b16 %v359
        %v646 = vunpack.c.l.b16 %v360
        %v647 = vunpack.c.h.b16 %v360
        %v648 = vunpack.c.l.b16 %v361
        %v649 = vunpack.c.h.b16 %v361
        %v650 = vunpack.c.l.b16 %v362
        %v651 = vunpack.c.h.b16 %v362
        %v652 = vunpack.c.l.b16 %v363
        %v653 = vunpack.c.h.b16 %v363
        %v654 = vunpack.c.l.b16 %v364
        %v655 = vunpack.c.h.b16 %v364
        %v656 = vunpack.c.l.b16 %v365
        %v657 = vunpack.c.h.b16 %v365
        %v658 = vunpack.c.l.b16 %v366
        %v659 = vunpack.c.h.b16 %v366
        %v660 = vunpack.c.l.b16 %v367
        %v661 = vunpack.c.h.b16 %v367
        %v662 = vunpack.c.l.b16 %v368
        %v663 = vunpack.c.h.b16 %v368
        %v664 = vunpack.c.l.b16 %v369
        %v665 = vunpack.c.h.b16 %v369
        %v666 = vunpack.c.l.b16 %v370
        %v667 = vunpack.c.h.b16 %v370
        %v668 = vunpack.c.l.b16 %v371
        %v669 = vunpack.c.h.b16 %v371
        %v670 = vunpack.c.l.b16 %v372
        %v671 = vunpack.c.h.b16 %v372
        %v672 = vunpack.c.l.b16 %v373
        %v673 = vunpack.c.h.b16 %v373
        %v674 = vunpack.c.l.b16 %v374
        %v675 = vunpack.c.h.b16 %v374
        %v676 = vunpack.c.l.b16 %v375
        %v677 = vunpack.c.h.b16 %v375
        %v678 = vunpack.c.l.b16 %v376
        %v679 = vunpack.c.h.b16 %v376
        %v680 = vunpack.c.l.b16 %v377
        %v681 = vunpack.c.h.b16 %v377
        %v682 = vunpack.c.l.b16 %v378
        %v683 = vunpack.c.h.b16 %v378
        %v684 = vunpack.c.l.b16 %v379
        %v685 = vunpack.c.h.b16 %v379
        %v686 = vunpack.c.l.b16 %v380
        %v687 = vunpack.c.h.b16 %v380
        %v688 = vunpack.c.l.b16 %v381
        %v689 = vunpack.c.h.b16 %v381
        %v690 = vunpack.c.l.b16 %v382
        %v691 = vunpack.c.h.b16 %v382
        %v692 = vunpack.c.l.b16 %v383
        %v693 = vunpack.c.h.b16 %v383
        %v694 = vunpack.c.l.b16 %v384
        %v695 = vunpack.c.h.b16 %v384
        %v696 = vunpack.c.l.b16 %v385
        %v697 = vunpack.c.h.b16 %v385
        %v698 = vunpack.c.l.b16 %v386
        %v699 = vunpack.c.h.b16 %v386
        %v700 = vunpack.c.l.b16 %v387
        %v701 = vunpack.c.h.b16 %v387
        %v702 = vunpack.c.l.b16 %v388
        %v703 = vunpack.c.h.b16 %v388
        %v704 = vunpack.c.l.b16 %v389
        %v705 = vunpack.c.h.b16 %v389
        %v706 = vunpack.c.l.b16 %v390
        %v707 = vunpack.c.h.b16 %v390
        %v708 = vunpack.c.l.b16 %v391
        %v709 = vunpack.c.h.b16 %v391
        %v710 = vunpack.c.l.b16 %v392
        %v711 = vunpack.c.h.b16 %v392
        %v712 = vunpack.c.l.b16 %v393
        %v713 = vunpack.c.h.b16 %v393
        %v714 = vunpack.c.l.b16 %v394
        %v715 = vunpack.c.h.b16 %v394
        %v716 = vunpack.c.l.b16 %v395
        %v717 = vunpack.c.h.b16 %v395
        %v718 = vunpack.c.l.b16 %v396
        %v719 = vunpack.c.h.b16 %v396
        %v720 = vunpack.c.l.b16 %v397
        %v721 = vunpack.c.h.b16 %v397
        %v722 = vunpack.c.l.b16 %v398
        %v723 = vunpack.c.h.b16 %v398
        %v724 = vunpack.c.l.b16 %v399
        %v725 = vunpack.c.h.b16 %v399
        %v726 = vunpack.c.l.b16 %v400
        %v727 = vunpack.c.h.b16 %v400
        %v728 = vunpack.c.l.b16 %v401
        %v729 = vunpack.c.h.b16 %v401
        %v730 = vunpack.c.l.b16 %v402
        %v731 = vunpack.c.h.b16 %v402
        %v732 = vunpack.c.l.b16 %v403
        %v733 = vunpack.c.h.b16 %v403
        %v734 = vunpack.c.l.b16 %v404
        %v735 = vunpack.c.h.b16 %v404
        %v736 = vunpack.c.l.b16 %v405
        %v737 = vunpack.c.h.b16 %v405
        %v738 = vunpack.c.l.b16 %v406
        %v739 = vunpack.c.h.b16 %v406
        %v740 = vunpack.c.l.b16 %v407
        %v741 = vunpack.c.h.b16 %v407
        %v742 = vunpack.c.l.b16 %v408
        %v743 = vunpack.c.h.b16 %v408
        %v744 = vunpack.c.l.b16 %v409
        %v745 = vunpack.c.h.b16 %v409
        %v746 = vunpack.c.l.b16 %v410
        %v747 = vunpack.c.h.b16 %v410
        %v748 = vunpack.c.l.b16 %v411
        %v749 = vunpack.c.h.b16 %v411
        %v750 = vunpack.c.l.b16 %v412
        %v751 = vunpack.c.h.b16 %v412
        %v752 = vunpack.c.l.b16 %v413
        %v753 = vunpack.c.h.b16 %v413
        %v754 = vunpack.c.l.b16 %v414
        %v755 = vunpack.c.h.b16 %v414
        %v756 = vunpack.c.l.b16 %v415
        %v757 = vunpack.c.h.b16 %v415
        %v758 = vunpack.c.l.b16 %v416
        %v759 = vunpack.c.h.b16 %v416
        %v760 = vunpack.c.l.b16 %v417
        %v761 = vunpack.c.h.b16 %v417
        %v762 = vunpack.c.l.b16 %v418
        %v763 = vunpack.c.h.b16 %v418
        %v764 = vunpack.c.l.b16 %v419
        %v765 = vunpack.c.h.b16 %v419
        %v766 = vunpack.c.l.b16 %v420
        %v767 = vunpack.c.h.b16 %v420
        %v768 = vunpack.c.l.b16 %v421
        %v769 = vunpack.c.h.b16 %v421
        %v770 = vunpack.c.l.b16 %v422
        %v771 = vunpack.c.h.b16 %v422
        %v772 = vunpack.c.l.b16 %v423
        %v773 = vunpack.c.h.b16 %v423
        %v774 = vunpack.c.l.b16 %v424
        %v775 = vunpack.c.h.b16 %v424
        %v776 = vunpack.c.l.b16 %v425
        %v777 = vunpack.c.h.b16 %v425
        %v778 = vunpack.c.l.b16 %v426
        %v779 = vunpack.c.h.b16 %v426
        %v780 = vunpack.c.l.b16 %v427
        %v781 = vunpack.c.h.b16 %v427
        %v782 = vunpack.c.l.b16 %v428
        %v783 = vunpack.c.h.b16 %v428
        %v784 = vunpack.c.l.b16 %v429
        %v785 = vunpack.c.h.b16 %v429
        %v786 = vunpack.c.l.b16 %v430
        %v787 = vunpack.c.h.b16 %v430
        %v788 = vunpack.c.l.b16 %v431
        %v789 = vunpack.c.h.b16 %v431
        %v790 = vunpack.c.l.b16 %v432
        %v791 = vunpack.c.h.b16 %v432
        %v792 = vunpack.c.l.b16 %v433
        %v793 = vunpack.c.h.b16 %v433
        %v794 = vunpack.c.l.b16 %v434
        %v795 = vunpack.c.h.b16 %v434
        %v796 = vunpack.c.l.b16 %v435
        %v797 = vunpack.c.h.b16 %v435
        %v798 = vunpack.c.l.b16 %v436
        %v799 = vunpack.c.h.b16 %v436
        %v800 = vunpack.c.l.b16 %v437
        %v801 = vunpack.c.h.b16 %v437
        %v802 = vunpack.c.l.b16 %v438
        %v803 = vunpack.c.h.b16 %v438
        %v804 = vunpack.c.l.b16 %v439
        %v805 = vunpack.c.h.b16 %v439
        %v806 = vunpack.c.l.b16 %v440
        %v807 = vunpack.c.h.b16 %v440
        %v808 = vunpack.c.l.b16 %v441
        %v809 = vunpack.c.h.b16 %v441
        %v810 = vunpack.c.l.b16 %v442
        %v811 = vunpack.c.h.b16 %v442
        %v812 = vunpack.c.l.b16 %v443
        %v813 = vunpack.c.h.b16 %v443
        %v814 = vunpack.c.l.b16 %v444
        %v815 = vunpack.c.h.b16 %v444
        %v816 = vunpack.c.l.b16 %v445
        %v817 = vunpack.c.h.b16 %v445
        %v818 = vunpack.c.l.b16 %v446
        %v819 = vunpack.c.h.b16 %v446
        %v820 = vunpack.c.l.b16 %v447
        %v821 = vunpack.c.h.b16 %v447
        %v822 = vunpack.c.l.b16 %v448
        %v823 = vunpack.c.h.b16 %v448
        %v824 = vunpack.c.l.b16 %v449
        %v825 = vunpack.c.h.b16 %v449
        %v826 = vunpack.c.l.b16 %v450
        %v827 = vunpack.c.h.b16 %v450
        %v828 = vunpack.c.l.b16 %v451
        %v829 = vunpack.c.h.b16 %v451
        %v830 = vunpack.c.l.b16 %v452
        %v831 = vunpack.c.h.b16 %v452
        %v832 = vunpack.c.l.b16 %v453
        %v833 = vunpack.c.h.b16 %v453
        %v834 = vunpack.c.l.b16 %v454
        %v835 = vunpack.c.h.b16 %v454
        %v836 = vunpack.c.l.b16 %v455
        %v837 = vunpack.c.h.b16 %v455
        %v838 = vunpack.c.l.b16 %v456
        %v839 = vunpack.c.h.b16 %v456
        %v840 = vunpack.c.l.b16 %v457
        %v841 = vunpack.c.h.b16 %v457
        %v842 = vunpack.c.l.b16 %v458
        %v843 = vunpack.c.h.b16 %v458
        %v844 = vunpack.c.l.b16 %v459
        %v845 = vunpack.c.h.b16 %v459
        %v846 = vunpack.c.l.b16 %v460
        %v847 = vunpack.c.h.b16 %v460
        %v848 = vunpack.c.l.b16 %v461
        %v849 = vunpack.c.h.b16 %v461
        %v850 = vunpack.c.l.b16 %v462
        %v851 = vunpack.c.h.b16 %v462
        %v852 = vunpack.c.l.b16 %v463
        %v853 = vunpack.c.h.b16 %v463
        %v854 = vunpack.c.l.b16 %v464
        %v855 = vunpack.c.h.b16 %v464
        %v856 = vunpack.c.l.b16 %v465
        %v857 = vunpack.c.h.b16 %v465
        %v858 = vunpack.c.l.b16 %v466
        %v859 = vunpack.c.h.b16 %v466
        %v860 = vunpack.c.l.b16 %v467
        %v861 = vunpack.c.h.b16 %v467
        %v862 = vunpack.c.l.b16 %v468
        %v863 = vunpack.c.h.b16 %v468
        %v864 = vunpack.c.l.b16 %v469
        %v865 = vunpack.c.h.b16 %v469
        %v866 = vunpack.c.l.b16 %v470
        %v867 = vunpack.c.h.b16 %v470
        %v868 = vunpack.c.l.b16 %v471
        %v869 = vunpack.c.h.b16 %v471
        %v870 = vunpack.c.l.b16 %v472
        %v871 = vunpack.c.h.b16 %v472
        %v872 = vunpack.c.l.b16 %v473
        %v873 = vunpack.c.h.b16 %v473
        %v874 = vunpack.c.l.b16 %v474
        %v875 = vunpack.c.h.b16 %v474
        %v876 = vunpack.c.l.b16 %v475
        %v877 = vunpack.c.h.b16 %v475
        %v878 = vunpack.c.l.b16 %v476
        %v879 = vunpack.c.h.b16 %v476
        %v880 = vunpack.c.l.b16 %v477
        %v881 = vunpack.c.h.b16 %v477
        %v882 = vpack.c.b16 %v630, %v626
        %v883 = vpack.c.b16 %v631, %v627
        %v884 = vpack.c.b16 %v632, %v628
        %v885 = vpack.c.b16 %v633, %v629
        %v886 = vpack.c.b16 %v638, %v634
        %v887 = vpack.c.b16 %v639, %v635
        %v888 = vpack.c.b16 %v640, %v636
        %v889 = vpack.c.b16 %v641, %v637
        %v890 = vpack.c.b16 %v646, %v642
        %v891 = vpack.c.b16 %v647, %v643
        %v892 = vpack.c.b16 %v648, %v644
        %v893 = vpack.c.b16 %v649, %v645
        %v894 = vpack.c.b16 %v654, %v650
        %v895 = vpack.c.b16 %v655, %v651
        %v896 = vpack.c.b16 %v656, %v652
        %v897 = vpack.c.b16 %v657, %v653
        %v898 = vpack.c.b16 %v662, %v658
        %v899 = vpack.c.b16 %v663, %v659
        %v900 = vpack.c.b16 %v664, %v660
        %v901 = vpack.c.b16 %v665, %v661
        %v902 = vpack.c.b16 %v670, %v666
        %v903 = vpack.c.b16 %v671, %v667
        %v904 = vpack.c.b16 %v672, %v668
        %v905 = vpack.c.b16 %v673, %v669
        %v906 = vpack.c.b16 %v678, %v674
        %v907 = vpack.c.b16 %v679, %v675
        %v908 = vpack.c.b16 %v680, %v676
        %v909 = vpack.c.b16 %v681, %v677
        %v910 = vpack.c.b16 %v686, %v682
        %v911 = vpack.c.b16 %v687, %v683
        %v912 = vpack.c.b16 %v688, %v684
        %v913 = vpack.c.b16 %v689, %v685
        %v914 = vpack.c.b16 %v694, %v690
        %v915 = vpack.c.b16 %v695, %v691
        %v916 = vpack.c.b16 %v696, %v692
        %v917 = vpack.c.b16 %v697, %v693
        %v918 = vpack.c.b16 %v702, %v698
        %v919 = vpack.c.b16 %v703, %v699
        %v920 = vpack.c.b16 %v704, %v700
        %v921 = vpack.c.b16 %v705, %v701
        %v922 = vpack.c.b16 %v710, %v706
        %v923 = vpack.c.b16 %v711, %v707
        %v924 = vpack.c.b16 %v712, %v708
        %v925 = vpack.c.b16 %v713, %v709
        %v926 = vpack.c.b16 %v718, %v714
        %v927 = vpack.c.b16 %v719, %v715
        %v928 = vpack.c.b16 %v720, %v716
        %v929 = vpack.c.b16 %v721, %v717
        %v930 = vpack.c.b16 %v726, %v722
        %v931 = vpack.c.b16 %v727, %v723
        %v932 = vpack.c.b16 %v728, %v724
        %v933 = vpack.c.b16 %v729, %v725
        %v934 = vpack.c.b16 %v734, %v730
        %v935 = vpack.c.b16 %v735, %v731
        %v936 = vpack.c.b16 %v736, %v732
        %v937 = vpack.c.b16 %v737, %v733
        %v938 = vpack.c.b16 %v742, %v738
        %v939 = vpack.c.b16 %v743, %v739
        %v940 = vpack.c.b16 %v744, %v740
        %v941 = vpack.c.b16 %v745, %v741
        %v942 = vpack.c.b16 %v750, %v746
        %v943 = vpack.c.b16 %v751, %v747
        %v944 = vpack.c.b16 %v752, %v748
        %v945 = vpack.c.b16 %v753, %v749
        %v946 = vpack.c.b16 %v758, %v754
        %v947 = vpack.c.b16 %v759, %v755
        %v948 = vpack.c.b16 %v760, %v756
        %v949 = vpack.c.b16 %v761, %v757
        %v950 = vpack.c.b16 %v766, %v762
        %v951 = vpack.c.b16 %v767, %v763
        %v952 = vpack.c.b16 %v768, %v764
        %v953 = vpack.c.b16 %v769, %v765
        %v954 = vpack.c.b16 %v774, %v770
        %v955 = vpack.c.b16 %v775, %v771
        %v956 = vpack.c.b16 %v776, %v772
        %v957 = vpack.c.b16 %v777, %v773
        %v958 = vpack.c.b16 %v782, %v778
        %v959 = vpack.c.b16 %v783, %v779
        %v960 = vpack.c.b16 %v784, %v780
        %v961 = vpack.c.b16 %v785, %v781
        %v962 = vpack.c.b16 %v790, %v786
        %v963 = vpack.c.b16 %v791, %v787
        %v964 = vpack.c.b16 %v792, %v788
        %v965 = vpack.c.b16 %v793, %v789
        %v966 = vpack.c.b16 %v798, %v794
        %v967 = vpack.c.b16 %v799, %v795
        %v968 = vpack.c.b16 %v800, %v796
        %v969 = vpack.c.b16 %v801, %v797
        %v970 = vpack.c.b16 %v806, %v802
        %v971 = vpack.c.b16 %v807, %v803
        %v972 = vpack.c.b16 %v808, %v804
        %v973 = vpack.c.b16 %v809, %v805
        %v974 = vpack.c.b16 %v814, %v810
        %v975 = vpack.c.b16 %v815, %v811
        %v976 = vpack.c.b16 %v816, %v812
        %v977 = vpack.c.b16 %v817, %v813
        %v978 = vpack.c.b16 %v822, %v818
        %v979 = vpack.c.b16 %v823, %v819
        %v980 = vpack.c.b16 %v824, %v820
        %v981 = vpack.c.b16 %v825, %v821
        %v982 = vpack.c.b16 %v830, %v826
        %v983 = vpack.c.b16 %v831, %v827
        %v984 = vpack.c.b16 %v832, %v828
        %v985 = vpack.c.b16 %v833, %v829
        %v986 = vpack.c.b16 %v838, %v834
        %v987 = vpack.c.b16 %v839, %v835
        %v988 = vpack.c.b16 %v840, %v836
        %v989 = vpack.c.b16 %v841, %v837
        %v990 = vpack.c.b16 %v846, %v842
        %v991 = vpack.c.b16 %v847, %v843
        %v992 = vpack.c.b16 %v848, %v844
        %v993 = vpack.c.b16 %v849, %v845
        %v994 = vpack.c.b16 %v854, %v850
        %v995 = vpack.c.b16 %v855, %v851
        %v996 = vpack.c.b16 %v856, %v852
        %v997 = vpack.c.b16 %v857, %v853
        %v998 = vpack.c.b16 %v862, %v858
        %v999 = vpack.c.b16 %v863, %v859
        %v1000 = vpack.c.b16 %v864, %v860
        %v1001 = vpack.c.b16 %v865, %v861
        %v1002 = vpack.c.b16 %v870, %v866
        %v1003 = vpack.c.b16 %v871, %v867
        %v1004 = vpack.c.b16 %v872, %v868
        %v1005 = vpack.c.b16 %v873, %v869
        %v1006 = vpack.c.b16 %v878, %v874
        %v1007 = vpack.c.b16 %v879, %v875
        %v1008 = vpack.c.b16 %v880, %v876
        %v1009 = vpack.c.b16 %v881, %v877
        %1138 = vmatprep.subr.bf16.mxu0 %v911
        %1139 = vmatpush1.bf16.msra.mxu0 %v910
        %1140 = vmatprep.subr.bf16.mxu0 %v907
        %1141 = vmatpush1.bf16.msra.mxu0 %v906
        %1142 = vmatprep.subr.bf16.mxu0 %v903
        %1143 = vmatpush1.bf16.msra.mxu0 %v902
        %1144 = vmatprep.subr.bf16.mxu0 %v899
        %1145 = vmatpush1.bf16.msra.mxu0 %v898
        %1146 = vmatprep.subr.bf16.mxu0 %v895
        %1147 = vmatpush1.bf16.msra.mxu0 %v894
        %1148 = vmatprep.subr.bf16.mxu0 %v891
        %1149 = vmatpush1.bf16.msra.mxu0 %v890
        %1150 = vmatprep.subr.bf16.mxu0 %v887
        %1151 = vmatpush1.bf16.msra.mxu0 %v886
        %1152 = vmatprep.subr.bf16.mxu0 %v883
        %1153 = vmatpush1.bf16.msra.mxu0 %v882
        %1154 = vmatprep.subr.bf16.mxu0 %v943
        %1155 = vmatpush2.bf16.msra.mxu0 %v942
        %1156 = vmatprep.subr.bf16.mxu0 %v939
        %1157 = vmatpush2.bf16.msra.mxu0 %v938
        %1158 = vmatprep.subr.bf16.mxu0 %v935
        %1159 = vmatpush2.bf16.msra.mxu0 %v934
        %1160 = vmatprep.subr.bf16.mxu0 %v931
        %1161 = vmatpush2.bf16.msra.mxu0 %v930
        %1162 = vmatprep.subr.bf16.mxu0 %v927
        %1163 = vmatpush2.bf16.msra.mxu0 %v926
        %1164 = vmatprep.subr.bf16.mxu0 %v923
        %1165 = vmatpush2.bf16.msra.mxu0 %v922
        %1166 = vmatprep.subr.bf16.mxu0 %v919
        %1167 = vmatpush2.bf16.msra.mxu0 %v918
        %1168 = vmatprep.subr.bf16.mxu0 %v915
        %1169 = vmatpush2.bf16.msra.mxu0 %v914
        %1170 = vmatprep.mubr.bf16.mxu0 %v491
        %1171 = vmatmul.mubr.bf16.gmra.mxu0 %v490
        %v1172 = vpop.f32.mrf.mxu0
        %v1173 = vadd.f32 0.0, %v1172
        %v1174 = vpop.f32.mrf.mxu0
        %v1175 = vadd.f32 0.0, %v1174
        %v1176 = vpop.f32.mrf.mxu0
        %v1177 = vadd.f32 0.0, %v1176
        %v1178 = vpop.f32.mrf.mxu0
        %v1179 = vadd.f32 0.0, %v1178
        %1180 = vdwg.mxu0
        %1181 = vmatprep.subr.bf16.mxu0 %v975
        %1182 = vmatpush1.bf16.msra.mxu0 %v974
        %1183 = vmatprep.subr.bf16.mxu0 %v971
        %1184 = vmatpush1.bf16.msra.mxu0 %v970
        %1185 = vmatprep.subr.bf16.mxu0 %v967
        %1186 = vmatpush1.bf16.msra.mxu0 %v966
        %1187 = vmatprep.subr.bf16.mxu0 %v963
        %1188 = vmatpush1.bf16.msra.mxu0 %v962
        %1189 = vmatprep.subr.bf16.mxu0 %v959
        %1190 = vmatpush1.bf16.msra.mxu0 %v958
        %1191 = vmatprep.subr.bf16.mxu0 %v955
        %1192 = vmatpush1.bf16.msra.mxu0 %v954
        %1193 = vmatprep.subr.bf16.mxu0 %v951
        %1194 = vmatpush1.bf16.msra.mxu0 %v950
        %1195 = vmatprep.subr.bf16.mxu0 %v947
        %1196 = vmatpush1.bf16.msra.mxu0 %v946
        %1197 = vmatprep.subr.bf16.mxu0 %v1007
        %1198 = vmatpush2.bf16.msra.mxu0 %v1006
        %1199 = vmatprep.subr.bf16.mxu0 %v1003
        %1200 = vmatpush2.bf16.msra.mxu0 %v1002
        %1201 = vmatprep.subr.bf16.mxu0 %v999
        %1202 = vmatpush2.bf16.msra.mxu0 %v998
        %1203 = vmatprep.subr.bf16.mxu0 %v995
        %1204 = vmatpush2.bf16.msra.mxu0 %v994
        %1205 = vmatprep.subr.bf16.mxu0 %v991
        %1206 = vmatpush2.bf16.msra.mxu0 %v990
        %1207 = vmatprep.subr.bf16.mxu0 %v987
        %1208 = vmatpush2.bf16.msra.mxu0 %v986
        %1209 = vmatprep.subr.bf16.mxu0 %v983
        %1210 = vmatpush2.bf16.msra.mxu0 %v982
        %1211 = vmatprep.subr.bf16.mxu0 %v979
        %1212 = vmatpush2.bf16.msra.mxu0 %v978
        %1213 = vmatprep.mubr.bf16.mxu0 %v493
        %1214 = vmatmul.mubr.bf16.gmra.mxu0 %v492
        %v1215 = vpop.f32.mrf.mxu0
        %v1216 = vadd.f32 %v1173, %v1215
        %v1217 = vpop.f32.mrf.mxu0
        %v1218 = vadd.f32 %v1175, %v1217
        %v1219 = vpop.f32.mrf.mxu0
        %v1220 = vadd.f32 %v1177, %v1219
        %v1221 = vpop.f32.mrf.mxu0
        %v1222 = vadd.f32 %v1179, %v1221
        %1223 = vdwg.mxu0
        %1224 = vmatprep.subr.bf16.mxu0 %v913
        %1225 = vmatpush1.bf16.msra.mxu0 %v912
        %1226 = vmatprep.subr.bf16.mxu0 %v909
        %1227 = vmatpush1.bf16.msra.mxu0 %v908
        %1228 = vmatprep.subr.bf16.mxu0 %v905
        %1229 = vmatpush1.bf16.msra.mxu0 %v904
        %1230 = vmatprep.subr.bf16.mxu0 %v901
        %1231 = vmatpush1.bf16.msra.mxu0 %v900
        %1232 = vmatprep.subr.bf16.mxu0 %v897
        %1233 = vmatpush1.bf16.msra.mxu0 %v896
        %1234 = vmatprep.subr.bf16.mxu0 %v893
        %1235 = vmatpush1.bf16.msra.mxu0 %v892
        %1236 = vmatprep.subr.bf16.mxu0 %v889
        %1237 = vmatpush1.bf16.msra.mxu0 %v888
        %1238 = vmatprep.subr.bf16.mxu0 %v885
        %1239 = vmatpush1.bf16.msra.mxu0 %v884
        %1240 = vmatprep.subr.bf16.mxu0 %v945
        %1241 = vmatpush2.bf16.msra.mxu0 %v944
        %1242 = vmatprep.subr.bf16.mxu0 %v941
        %1243 = vmatpush2.bf16.msra.mxu0 %v940
        %1244 = vmatprep.subr.bf16.mxu0 %v937
        %1245 = vmatpush2.bf16.msra.mxu0 %v936
        %1246 = vmatprep.subr.bf16.mxu0 %v933
        %1247 = vmatpush2.bf16.msra.mxu0 %v932
        %1248 = vmatprep.subr.bf16.mxu0 %v929
        %1249 = vmatpush2.bf16.msra.mxu0 %v928
        %1250 = vmatprep.subr.bf16.mxu0 %v925
        %1251 = vmatpush2.bf16.msra.mxu0 %v924
        %1252 = vmatprep.subr.bf16.mxu0 %v921
        %1253 = vmatpush2.bf16.msra.mxu0 %v920
        %1254 = vmatprep.subr.bf16.mxu0 %v917
        %1255 = vmatpush2.bf16.msra.mxu0 %v916
        %1256 = vmatprep.mubr.bf16.mxu0 %v491
        %1257 = vmatmul.mubr.bf16.gmra.mxu0 %v490
        %v1258 = vpop.f32.mrf.mxu0
        %v1259 = vadd.f32 0.0, %v1258
        %v1260 = vpop.f32.mrf.mxu0
        %v1261 = vadd.f32 0.0, %v1260
        %v1262 = vpop.f32.mrf.mxu0
        %v1263 = vadd.f32 0.0, %v1262
        %v1264 = vpop.f32.mrf.mxu0
        %v1265 = vadd.f32 0.0, %v1264
        %1266 = vdwg.mxu0
        %1267 = vmatprep.subr.bf16.mxu0 %v977
        %1268 = vmatpush1.bf16.msra.mxu0 %v976
        %1269 = vmatprep.subr.bf16.mxu0 %v973
        %1270 = vmatpush1.bf16.msra.mxu0 %v972
        %1271 = vmatprep.subr.bf16.mxu0 %v969
        %1272 = vmatpush1.bf16.msra.mxu0 %v968
        %1273 = vmatprep.subr.bf16.mxu0 %v965
        %1274 = vmatpush1.bf16.msra.mxu0 %v964
        %1275 = vmatprep.subr.bf16.mxu0 %v961
        %1276 = vmatpush1.bf16.msra.mxu0 %v960
        %1277 = vmatprep.subr.bf16.mxu0 %v957
        %1278 = vmatpush1.bf16.msra.mxu0 %v956
        %1279 = vmatprep.subr.bf16.mxu0 %v953
        %1280 = vmatpush1.bf16.msra.mxu0 %v952
        %1281 = vmatprep.subr.bf16.mxu0 %v949
        %1282 = vmatpush1.bf16.msra.mxu0 %v948
        %1283 = vmatprep.subr.bf16.mxu0 %v1009
        %1284 = vmatpush2.bf16.msra.mxu0 %v1008
        %1285 = vmatprep.subr.bf16.mxu0 %v1005
        %1286 = vmatpush2.bf16.msra.mxu0 %v1004
        %1287 = vmatprep.subr.bf16.mxu0 %v1001
        %1288 = vmatpush2.bf16.msra.mxu0 %v1000
        %1289 = vmatprep.subr.bf16.mxu0 %v997
        %1290 = vmatpush2.bf16.msra.mxu0 %v996
        %1291 = vmatprep.subr.bf16.mxu0 %v993
        %1292 = vmatpush2.bf16.msra.mxu0 %v992
        %1293 = vmatprep.subr.bf16.mxu0 %v989
        %1294 = vmatpush2.bf16.msra.mxu0 %v988
        %1295 = vmatprep.subr.bf16.mxu0 %v985
        %1296 = vmatpush2.bf16.msra.mxu0 %v984
        %1297 = vmatprep.subr.bf16.mxu0 %v981
        %1298 = vmatpush2.bf16.msra.mxu0 %v980
        %1299 = vmatprep.mubr.bf16.mxu0 %v493
        %1300 = vmatmul.mubr.bf16.gmra.mxu0 %v492
        %v1301 = vpop.f32.mrf.mxu0
        %v1302 = vadd.f32 %v1259, %v1301
        %v1303 = vpop.f32.mrf.mxu0
        %v1304 = vadd.f32 %v1261, %v1303
        %v1305 = vpop.f32.mrf.mxu0
        %v1306 = vadd.f32 %v1263, %v1305
        %v1307 = vpop.f32.mrf.mxu0
        %v1308 = vadd.f32 %v1265, %v1307
        %1309 = vdwg.mxu0
        %v1310 = vadd.f32 %v338, %v1216
        %v1311 = vadd.f32 %v339, %v1218
        %v1312 = vadd.f32 %v340, %v1302
        %v1313 = vadd.f32 %v341, %v1304
        %v1314 = vadd.f32 %v342, %v1220
        %v1315 = vadd.f32 %v343, %v1222
        %v1316 = vadd.f32 %v344, %v1306
        %v1317 = vadd.f32 %v345, %v1308
        %1318 = vst [vmem:[#allocation2] sm:$0xff] %v1310
        %1319 = vst [vmem:[#allocation2 + $0x8] sm:$0xff] %v1311
        %1320 = vst [vmem:[#allocation2 + $0x10] sm:$0xff] %v1312
        %1321 = vst [vmem:[#allocation2 + $0x18] sm:$0xff] %v1313
        %1322 = vst [vmem:[#allocation2 + $0x20] sm:$0xff] %v1314
        %1323 = vst [vmem:[#allocation2 + $0x28] sm:$0xff] %v1315
        %1324 = vst [vmem:[#allocation2 + $0x30] sm:$0xff] %v1316
        %1325 = vst [vmem:[#allocation2 + $0x38] sm:$0xff] %v1317
        %p1326 = scmp.eq.s32.totalorder %s29, 1
        // Predicated region
        $region61: #{tpu_custom_call.1} parent=39 // pred_check
          %p1327 = pneg %p1326
        $region62: #{tpu_custom_call.1} parent=39 // pred_check_branch
          %1329 = sbr.rel (%p1327) target = $region64
        $region63: #{tpu_custom_call.1} parent=39 // pred_region
          %v1330 = vld [vmem:[#allocation2] sm:$0xff]
          %v1331 = vld [vmem:[#allocation2 + $0x8] sm:$0xff]
          %v1332 = vld [vmem:[#allocation2 + $0x10] sm:$0xff]
          %v1333 = vld [vmem:[#allocation2 + $0x18] sm:$0xff]
          %v1334 = vld [vmem:[#allocation2 + $0x20] sm:$0xff]
          %v1335 = vld [vmem:[#allocation2 + $0x28] sm:$0xff]
          %v1336 = vld [vmem:[#allocation2 + $0x30] sm:$0xff]
          %v1337 = vld [vmem:[#allocation2 + $0x38] sm:$0xff]
          %v1338 = vld [vmem:[#allocation8] sm:$0xf]
          %v1340 = vlaneseq
          %v1341 = vshrl.u32 %v1340, 7
          %v1342 = vsub.s32 0, %v1341
          %v1343 = vrot.slane %v1338, %v1342
          %v1344 = vlaneseq
          %v1345 = vshrl.u32 %v1344, 7
          %v1346 = vsub.s32 1, %v1345
          %v1347 = vrot.slane %v1338, %v1346
          %v1348 = vlaneseq
          %v1349 = vshrl.u32 %v1348, 7
          %v1350 = vsub.s32 2, %v1349
          %v1351 = vrot.slane %v1338, %v1350
          %v1352 = vlaneseq
          %v1353 = vshrl.u32 %v1352, 7
          %v1354 = vsub.s32 3, %v1353
          %v1355 = vrot.slane %v1338, %v1354
          %v1360 = vadd.f32 %v1330, %v1343
          %v1361 = vadd.f32 %v1331, %v1347
          %v1362 = vadd.f32 %v1332, %v1351
          %v1363 = vadd.f32 %v1333, %v1355
          %v1364 = vadd.f32 %v1334, %v1343
          %v1365 = vadd.f32 %v1335, %v1347
          %v1366 = vadd.f32 %v1336, %v1351
          %v1367 = vadd.f32 %v1337, %v1355
          %v1368 = vmax.f32 %v1360, 0.0
          %v1369 = vmax.f32 %v1361, 0.0
          %v1370 = vmax.f32 %v1362, 0.0
          %v1371 = vmax.f32 %v1363, 0.0
          %v1372 = vmax.f32 %v1364, 0.0
          %v1373 = vmax.f32 %v1365, 0.0
          %v1374 = vmax.f32 %v1366, 0.0
          %v1375 = vmax.f32 %v1367, 0.0
          %v1376 = vpack.c.bf16 %v1372, %v1368
          %v1377 = vpack.c.bf16 %v1373, %v1369
          %v1378 = vpack.c.bf16 %v1374, %v1370
          %v1379 = vpack.c.bf16 %v1375, %v1371
          %v1380 = vld [vmem:[#allocation9] sm:$0xf]
          %v1381 = vld [vmem:[#allocation9 + $0x4] sm:$0xf]
          %v1382 = vld [vmem:[#allocation9 + $0x8] sm:$0xf]
          %v1383 = vld [vmem:[#allocation9 + $0xc] sm:$0xf]
          %v1384 = vld [vmem:[#allocation9 + $0x10] sm:$0xf]
          %v1385 = vld [vmem:[#allocation9 + $0x14] sm:$0xf]
          %v1386 = vld [vmem:[#allocation9 + $0x18] sm:$0xf]
          %v1387 = vld [vmem:[#allocation9 + $0x1c] sm:$0xf]
          %v1388 = vld [vmem:[#allocation9 + $0x20] sm:$0xf]
          %v1389 = vld [vmem:[#allocation9 + $0x24] sm:$0xf]
          %v1390 = vld [vmem:[#allocation9 + $0x28] sm:$0xf]
          %v1391 = vld [vmem:[#allocation9 + $0x2c] sm:$0xf]
          %v1392 = vld [vmem:[#allocation9 + $0x30] sm:$0xf]
          %v1393 = vld [vmem:[#allocation9 + $0x34] sm:$0xf]
          %v1394 = vld [vmem:[#allocation9 + $0x38] sm:$0xf]
          %v1395 = vld [vmem:[#allocation9 + $0x3c] sm:$0xf]
          %v1396 = vld [vmem:[#allocation9 + $0x40] sm:$0xf]
          %v1397 = vld [vmem:[#allocation9 + $0x44] sm:$0xf]
          %v1398 = vld [vmem:[#allocation9 + $0x48] sm:$0xf]
          %v1399 = vld [vmem:[#allocation9 + $0x4c] sm:$0xf]
          %v1400 = vld [vmem:[#allocation9 + $0x50] sm:$0xf]
          %v1401 = vld [vmem:[#allocation9 + $0x54] sm:$0xf]
          %v1402 = vld [vmem:[#allocation9 + $0x58] sm:$0xf]
          %v1403 = vld [vmem:[#allocation9 + $0x5c] sm:$0xf]
          %v1404 = vld [vmem:[#allocation9 + $0x60] sm:$0xf]
          %v1405 = vld [vmem:[#allocation9 + $0x64] sm:$0xf]
          %v1406 = vld [vmem:[#allocation9 + $0x68] sm:$0xf]
          %v1407 = vld [vmem:[#allocation9 + $0x6c] sm:$0xf]
          %v1408 = vld [vmem:[#allocation9 + $0x70] sm:$0xf]
          %v1409 = vld [vmem:[#allocation9 + $0x74] sm:$0xf]
          %v1410 = vld [vmem:[#allocation9 + $0x78] sm:$0xf]
          %v1411 = vld [vmem:[#allocation9 + $0x7c] sm:$0xf]
          %v1412 = vld [vmem:[#allocation9 + $0x80] sm:$0xf]
          %v1413 = vld [vmem:[#allocation9 + $0x84] sm:$0xf]
          %v1414 = vld [vmem:[#allocation9 + $0x88] sm:$0xf]
          %v1415 = vld [vmem:[#allocation9 + $0x8c] sm:$0xf]
          %v1416 = vld [vmem:[#allocation9 + $0x90] sm:$0xf]
          %v1417 = vld [vmem:[#allocation9 + $0x94] sm:$0xf]
          %v1418 = vld [vmem:[#allocation9 + $0x98] sm:$0xf]
          %v1419 = vld [vmem:[#allocation9 + $0x9c] sm:$0xf]
          %v1420 = vld [vmem:[#allocation9 + $0xa0] sm:$0xf]
          %v1421 = vld [vmem:[#allocation9 + $0xa4] sm:$0xf]
          %v1422 = vld [vmem:[#allocation9 + $0xa8] sm:$0xf]
          %v1423 = vld [vmem:[#allocation9 + $0xac] sm:$0xf]
          %v1424 = vld [vmem:[#allocation9 + $0xb0] sm:$0xf]
          %v1425 = vld [vmem:[#allocation9 + $0xb4] sm:$0xf]
          %v1426 = vld [vmem:[#allocation9 + $0xb8] sm:$0xf]
          %v1427 = vld [vmem:[#allocation9 + $0xbc] sm:$0xf]
          %v1428 = vld [vmem:[#allocation9 + $0xc0] sm:$0xf]
          %v1429 = vld [vmem:[#allocation9 + $0xc4] sm:$0xf]
          %v1430 = vld [vmem:[#allocation9 + $0xc8] sm:$0xf]
          %v1431 = vld [vmem:[#allocation9 + $0xcc] sm:$0xf]
          %v1432 = vld [vmem:[#allocation9 + $0xd0] sm:$0xf]
          %v1433 = vld [vmem:[#allocation9 + $0xd4] sm:$0xf]
          %v1434 = vld [vmem:[#allocation9 + $0xd8] sm:$0xf]
          %v1435 = vld [vmem:[#allocation9 + $0xdc] sm:$0xf]
          %v1436 = vld [vmem:[#allocation9 + $0xe0] sm:$0xf]
          %v1437 = vld [vmem:[#allocation9 + $0xe4] sm:$0xf]
          %v1438 = vld [vmem:[#allocation9 + $0xe8] sm:$0xf]
          %v1439 = vld [vmem:[#allocation9 + $0xec] sm:$0xf]
          %v1440 = vld [vmem:[#allocation9 + $0xf0] sm:$0xf]
          %v1441 = vld [vmem:[#allocation9 + $0xf4] sm:$0xf]
          %v1442 = vld [vmem:[#allocation9 + $0xf8] sm:$0xf]
          %v1443 = vld [vmem:[#allocation9 + $0xfc] sm:$0xf]
          %v1444 = vld [vmem:[%s4] sm:$0x1]
          %v1446 = vlaneseq
          %v1447 = vshrl.u32 %v1446, 7
          %v1448 = vsub.s32 0, %v1447
          %v1449 = vrot.slane %v1444, %v1448
          %v1515 = vunpack.c.l.b16 %v1380
          %v1516 = vunpack.c.l.b16 %v1381
          %v1517 = vunpack.c.l.b16 %v1382
          %v1518 = vunpack.c.l.b16 %v1383
          %v1519 = vunpack.c.l.b16 %v1384
          %v1520 = vunpack.c.l.b16 %v1385
          %v1521 = vunpack.c.l.b16 %v1386
          %v1522 = vunpack.c.l.b16 %v1387
          %v1523 = vunpack.c.l.b16 %v1388
          %v1524 = vunpack.c.l.b16 %v1389
          %v1525 = vunpack.c.l.b16 %v1390
          %v1526 = vunpack.c.l.b16 %v1391
          %v1527 = vunpack.c.l.b16 %v1392
          %v1528 = vunpack.c.l.b16 %v1393
          %v1529 = vunpack.c.l.b16 %v1394
          %v1530 = vunpack.c.l.b16 %v1395
          %v1531 = vunpack.c.l.b16 %v1396
          %v1532 = vunpack.c.l.b16 %v1397
          %v1533 = vunpack.c.l.b16 %v1398
          %v1534 = vunpack.c.l.b16 %v1399
          %v1535 = vunpack.c.l.b16 %v1400
          %v1536 = vunpack.c.l.b16 %v1401
          %v1537 = vunpack.c.l.b16 %v1402
          %v1538 = vunpack.c.l.b16 %v1403
          %v1539 = vunpack.c.l.b16 %v1404
          %v1540 = vunpack.c.l.b16 %v1405
          %v1541 = vunpack.c.l.b16 %v1406
          %v1542 = vunpack.c.l.b16 %v1407
          %v1543 = vunpack.c.l.b16 %v1408
          %v1544 = vunpack.c.l.b16 %v1409
          %v1545 = vunpack.c.l.b16 %v1410
          %v1546 = vunpack.c.l.b16 %v1411
          %v1547 = vunpack.c.l.b16 %v1412
          %v1548 = vunpack.c.l.b16 %v1413
          %v1549 = vunpack.c.l.b16 %v1414
          %v1550 = vunpack.c.l.b16 %v1415
          %v1551 = vunpack.c.l.b16 %v1416
          %v1552 = vunpack.c.l.b16 %v1417
          %v1553 = vunpack.c.l.b16 %v1418
          %v1554 = vunpack.c.l.b16 %v1419
          %v1555 = vunpack.c.l.b16 %v1420
          %v1556 = vunpack.c.l.b16 %v1421
          %v1557 = vunpack.c.l.b16 %v1422
          %v1558 = vunpack.c.l.b16 %v1423
          %v1559 = vunpack.c.l.b16 %v1424
          %v1560 = vunpack.c.l.b16 %v1425
          %v1561 = vunpack.c.l.b16 %v1426
          %v1562 = vunpack.c.l.b16 %v1427
          %v1563 = vunpack.c.l.b16 %v1428
          %v1564 = vunpack.c.l.b16 %v1429
          %v1565 = vunpack.c.l.b16 %v1430
          %v1566 = vunpack.c.l.b16 %v1431
          %v1567 = vunpack.c.l.b16 %v1432
          %v1568 = vunpack.c.l.b16 %v1433
          %v1569 = vunpack.c.l.b16 %v1434
          %v1570 = vunpack.c.l.b16 %v1435
          %v1571 = vunpack.c.l.b16 %v1436
          %v1572 = vunpack.c.l.b16 %v1437
          %v1573 = vunpack.c.l.b16 %v1438
          %v1574 = vunpack.c.l.b16 %v1439
          %v1575 = vunpack.c.l.b16 %v1440
          %v1576 = vunpack.c.l.b16 %v1441
          %v1577 = vunpack.c.l.b16 %v1442
          %v1578 = vunpack.c.l.b16 %v1443
          %v1579 = vpack.c.b16 %v1516, %v1515
          %v1580 = vpack.c.b16 %v1518, %v1517
          %v1581 = vpack.c.b16 %v1520, %v1519
          %v1582 = vpack.c.b16 %v1522, %v1521
          %v1583 = vpack.c.b16 %v1524, %v1523
          %v1584 = vpack.c.b16 %v1526, %v1525
          %v1585 = vpack.c.b16 %v1528, %v1527
          %v1586 = vpack.c.b16 %v1530, %v1529
          %v1587 = vpack.c.b16 %v1532, %v1531
          %v1588 = vpack.c.b16 %v1534, %v1533
          %v1589 = vpack.c.b16 %v1536, %v1535
          %v1590 = vpack.c.b16 %v1538, %v1537
          %v1591 = vpack.c.b16 %v1540, %v1539
          %v1592 = vpack.c.b16 %v1542, %v1541
          %v1593 = vpack.c.b16 %v1544, %v1543
          %v1594 = vpack.c.b16 %v1546, %v1545
          %v1595 = vpack.c.b16 %v1548, %v1547
          %v1596 = vpack.c.b16 %v1550, %v1549
          %v1597 = vpack.c.b16 %v1552, %v1551
          %v1598 = vpack.c.b16 %v1554, %v1553
          %v1599 = vpack.c.b16 %v1556, %v1555
          %v1600 = vpack.c.b16 %v1558, %v1557
          %v1601 = vpack.c.b16 %v1560, %v1559
          %v1602 = vpack.c.b16 %v1562, %v1561
          %v1603 = vpack.c.b16 %v1564, %v1563
          %v1604 = vpack.c.b16 %v1566, %v1565
          %v1605 = vpack.c.b16 %v1568, %v1567
          %v1606 = vpack.c.b16 %v1570, %v1569
          %v1607 = vpack.c.b16 %v1572, %v1571
          %v1608 = vpack.c.b16 %v1574, %v1573
          %v1609 = vpack.c.b16 %v1576, %v1575
          %v1610 = vpack.c.b16 %v1578, %v1577
          %1643 = vmatprep.subr.bf16.mxu0 0
          %1644 = vmatpush1.bf16.msra.mxu0 %v1586
          %1645 = vmatprep.subr.bf16.mxu0 0
          %1646 = vmatpush1.bf16.msra.mxu0 %v1585
          %1647 = vmatprep.subr.bf16.mxu0 0
          %1648 = vmatpush1.bf16.msra.mxu0 %v1584
          %1649 = vmatprep.subr.bf16.mxu0 0
          %1650 = vmatpush1.bf16.msra.mxu0 %v1583
          %1651 = vmatprep.subr.bf16.mxu0 0
          %1652 = vmatpush1.bf16.msra.mxu0 %v1582
          %1653 = vmatprep.subr.bf16.mxu0 0
          %1654 = vmatpush1.bf16.msra.mxu0 %v1581
          %1655 = vmatprep.subr.bf16.mxu0 0
          %1656 = vmatpush1.bf16.msra.mxu0 %v1580
          %1657 = vmatprep.subr.bf16.mxu0 0
          %1658 = vmatpush1.bf16.msra.mxu0 %v1579
          %1659 = vmatprep.subr.bf16.mxu0 0
          %1660 = vmatpush2.bf16.msra.mxu0 %v1594
          %1661 = vmatprep.subr.bf16.mxu0 0
          %1662 = vmatpush2.bf16.msra.mxu0 %v1593
          %1663 = vmatprep.subr.bf16.mxu0 0
          %1664 = vmatpush2.bf16.msra.mxu0 %v1592
          %1665 = vmatprep.subr.bf16.mxu0 0
          %1666 = vmatpush2.bf16.msra.mxu0 %v1591
          %1667 = vmatprep.subr.bf16.mxu0 0
          %1668 = vmatpush2.bf16.msra.mxu0 %v1590
          %1669 = vmatprep.subr.bf16.mxu0 0
          %1670 = vmatpush2.bf16.msra.mxu0 %v1589
          %1671 = vmatprep.subr.bf16.mxu0 0
          %1672 = vmatpush2.bf16.msra.mxu0 %v1588
          %1673 = vmatprep.subr.bf16.mxu0 0
          %1674 = vmatpush2.bf16.msra.mxu0 %v1587
          %1675 = vmatprep.mubr.bf16.mxu0 %v1377
          %1676 = vmatmul.mubr.bf16.gmra.mxu0 %v1376
          %v1677 = vpop.f32.mrf.mxu0
          %v1678 = vadd.f32 %v1449, %v1677
          %v1679 = vpop.f32.mrf.mxu0
          %v1680 = vpop.f32.mrf.mxu0
          %v1681 = vadd.f32 %v1449, %v1680
          %v1682 = vpop.f32.mrf.mxu0
          %1683 = vdwg.mxu0
          %1684 = vmatprep.subr.bf16.mxu0 0
          %1685 = vmatpush1.bf16.msra.mxu0 %v1602
          %1686 = vmatprep.subr.bf16.mxu0 0
          %1687 = vmatpush1.bf16.msra.mxu0 %v1601
          %1688 = vmatprep.subr.bf16.mxu0 0
          %1689 = vmatpush1.bf16.msra.mxu0 %v1600
          %1690 = vmatprep.subr.bf16.mxu0 0
          %1691 = vmatpush1.bf16.msra.mxu0 %v1599
          %1692 = vmatprep.subr.bf16.mxu0 0
          %1693 = vmatpush1.bf16.msra.mxu0 %v1598
          %1694 = vmatprep.subr.bf16.mxu0 0
          %1695 = vmatpush1.bf16.msra.mxu0 %v1597
          %1696 = vmatprep.subr.bf16.mxu0 0
          %1697 = vmatpush1.bf16.msra.mxu0 %v1596
          %1698 = vmatprep.subr.bf16.mxu0 0
          %1699 = vmatpush1.bf16.msra.mxu0 %v1595
          %1700 = vmatprep.subr.bf16.mxu0 0
          %1701 = vmatpush2.bf16.msra.mxu0 %v1610
          %1702 = vmatprep.subr.bf16.mxu0 0
          %1703 = vmatpush2.bf16.msra.mxu0 %v1609
          %1704 = vmatprep.subr.bf16.mxu0 0
          %1705 = vmatpush2.bf16.msra.mxu0 %v1608
          %1706 = vmatprep.subr.bf16.mxu0 0
          %1707 = vmatpush2.bf16.msra.mxu0 %v1607
          %1708 = vmatprep.subr.bf16.mxu0 0
          %1709 = vmatpush2.bf16.msra.mxu0 %v1606
          %1710 = vmatprep.subr.bf16.mxu0 0
          %1711 = vmatpush2.bf16.msra.mxu0 %v1605
          %1712 = vmatprep.subr.bf16.mxu0 0
          %1713 = vmatpush2.bf16.msra.mxu0 %v1604
          %1714 = vmatprep.subr.bf16.mxu0 0
          %1715 = vmatpush2.bf16.msra.mxu0 %v1603
          %1716 = vmatprep.mubr.bf16.mxu0 %v1379
          %1717 = vmatmul.mubr.bf16.gmra.mxu0 %v1378
          %v1718 = vpop.f32.mrf.mxu0
          %v1719 = vadd.f32 %v1678, %v1718
          %v1720 = vpop.f32.mrf.mxu0
          %v1721 = vpop.f32.mrf.mxu0
          %v1722 = vadd.f32 %v1681, %v1721
          %v1723 = vpop.f32.mrf.mxu0
          %1724 = vdwg.mxu0
          %1725 = vst [vmem:[#allocation11] sm:$0xff] %v1719
          %1726 = vst [vmem:[#allocation11 + $0x8] sm:$0xff] %v1722
        $region64: #{tpu_custom_call.1} parent=39 // pred_fallthru
          _
        // Predicated region
        $region65: #{tpu_custom_call.1} parent=39 // pred_check
          %p1727 = pneg %p171
        $region66: #{tpu_custom_call.1} parent=39 // pred_check_branch
          %1729 = sbr.rel (%p1727) target = $region68
        $region67: #{tpu_custom_call.1} parent=39 // pred_region
          %s1730 = smul.u32 2, %s28
          %s1732 = ssub.s32 256, 256
          %1733 = vsyncadd [#allocation5], %s1732
          %s1734 = smul.addr %s1730, 128
          %s1735 = scalar_lea.hbm %s5, %s1734
          %s1736 = sshll.u32 [#allocation11], 4
          %s1737 = int_to_ptr.vmem [resolvable:$true] %s1736
          %1742 = dma.vmem_to_hbm [thread:$0]  %s1737, 256, %s1735, [#allocation5], 128, 128, 8
        $region68: #{tpu_custom_call.1} parent=39 // pred_fallthru
          _
        // Predicated region
        $region69: #{tpu_custom_call.1} parent=39 // pred_check
          %p1743 = pneg %p171
        $region70: #{tpu_custom_call.1} parent=39 // pred_check_branch
          %1745 = sbr.rel (%p1743) target = $region72
        $region71: #{tpu_custom_call.1} parent=39 // pred_region
          %1746 = dma.done [#allocation5], 256
        $region72: #{tpu_custom_call.1} parent=39 // pred_fallthru
          _
      $region40: #{tpu_custom_call.1} parent=5 // pred_fallthru
        _
      %p1747 = scmp.le.s32.totalorder 2, %s19
      // Predicated region
      $region73: #{tpu_custom_call.1} parent=5 // pred_check
        %p1748 = pneg %p1747
      $region74: #{tpu_custom_call.1} parent=5 // pred_check_branch
        %1750 = sbr.rel (%p1748) target = $region76
      $region75: #{tpu_custom_call.1} parent=5 // pred_region
        %s1751 = ssub.s32 %s19, 2
      $region76: #{tpu_custom_call.1} parent=5 // pred_fallthru
        _
    $region6: #{tpu_custom_call.1} parent=1 // loop_footer
      %s23 = sadd.s32 1, %s19
    $region7: #{tpu_custom_call.1} parent=1 // loop_footer_branch
      %18 = sbr.rel target = $region3
    $region8: #{tpu_custom_call.1} parent=1 // loop_exit
      _
    %1752 = vsyncpa [#allocation4], 1
    %s1753 = scalar_lea.sflag [#allocation4], 1
    %1754 = vsyncpa %s1753, 1
    %1755 = vsyncpa [#allocation7], 1
    %s1756 = scalar_lea.sflag [#allocation7], 1
    %1757 = vsyncpa %s1756, 1
    %1758 = vsyncpa [#allocation10], 1
    %1759 = vsyncpa [#allocation5], 1
    %s1760 = scalar_lea.sflag [#allocation5], 1
    %1761 = vsyncpa %s1760, 1

</llo_original>
